<compile_context>
chip_gen: v5e
topology: v5e:2x2
jax: 0.10.0
libtpu: 0.0.40
codegen_flags: <defaults>
</compile_context>

<pallas_src>
import jax
import jax.numpy as jnp
from jax.experimental import pallas as pl
from jax.experimental.pallas import tpu as pltpu

# ---------------- module config ----------------
INP = 4
OUP = 4
STRIDE = 1
EXPAND_RATIO = 6
HIDDEN = int(INP * EXPAND_RATIO)            # 24
USE_RES = (STRIDE == 1 and INP == OUP)      # True for this config
BN_EPS = 1e-5


def _make_kernel(N, H, W, cin, hidden, oup):
    HW = H * W
    NHW = N * HW
    inv_nhw = 1.0 / float(NHW)

    def _bn(h, g, b, relu6):
        # Training-mode BN (PyTorch semantics): per-channel stats over all N*H*W lanes,
        # computed in one pass (E[x^2]-mean^2).  g/b stay (C,1) and combine with the
        # data-dependent scale/shift BEFORE the single unavoidable lane broadcast.
        s1 = jnp.sum(h, axis=1, keepdims=True)                        # (C,1)
        s2 = jnp.sum(h * h, axis=1, keepdims=True)                    # (C,1)
        mean = s1 * inv_nhw
        var = s2 * inv_nhw - mean * mean
        scale = jax.lax.rsqrt(var + BN_EPS) * g                       # (C,1)
        shift = b - mean * scale                                      # (C,1)
        y = h * scale + shift
        return jnp.clip(y, 0.0, 6.0) if relu6 else y

    def kernel(x_ref, ph1_ref, dw_ref, ph3_ref, o_ref, x2d_sc):
        # Gather the batch into the lane axis: (N,C,HW) -> (C, N*HW).
        # Lane-aligned static slice copies (HW is a multiple of 128 here).
        for n in range(N):
            x2d_sc[:, n * HW:(n + 1) * HW] = x_ref[n]
        x2d = x2d_sc[...]                                             # (cin, NHW)

        # Unpack small per-channel params (stay (C,1); no broadcasts here).
        w1 = ph1_ref[:, 0:cin]                                        # (hidden, cin)
        g1 = ph1_ref[:, cin + 0:cin + 1]
        b1 = ph1_ref[:, cin + 1:cin + 2]
        g2 = ph1_ref[:, cin + 2:cin + 3]
        b2 = ph1_ref[:, cin + 3:cin + 4]
        w3 = ph3_ref[:, 0:hidden]                                     # (oup, hidden)
        g3 = ph3_ref[:, hidden + 0:hidden + 1]
        b3 = ph3_ref[:, hidden + 1:hidden + 2]

        # ---- 1x1 expand conv (single MXU matmul, default precision) + BN + ReLU6 ----
        h = jnp.dot(w1, x2d, preferred_element_type=jnp.float32)      # (hidden, NHW)
        h = _bn(h, g1, b1, relu6=True)

        # ---- 3x3 depthwise, stride 1, pad 1: lane rolls + pre-masked replicated taps ----
        # dw_ref[k] already holds tap_value[c] * edge_mask[lane] replicated over all
        # lanes, so each tap is one XLU roll + one VPU FMA (plain vector loads, no
        # selects / iota / lane broadcasts).  Single-expression bodies keep only one
        # `shifted` buffer live at a time to stay under the 64-vreg file.
        # TODO(synk): if a bundle dump shows spills here, process the lane axis in halves.
        acc = h * dw_ref[4]                                           # center tap (dy=dx=0)
        for dy in range(3):
            for dx in range(3):
                if dy == 1 and dx == 1:
                    continue
                off = (dy - 1) * W + (dx - 1)
                shift = (-off) % NHW                                  # shifted[p] = h[p+off]
                acc = acc + pltpu.roll(h, shift, axis=1) * dw_ref[dy * 3 + dx]
        h = _bn(acc, g2, b2, relu6=True)

        # ---- 1x1 projection (MXU) + BN (no ReLU) + residual ----
        y = jnp.dot(w3, h, preferred_element_type=jnp.float32)        # (oup, NHW)
        y = _bn(y, g3, b3, relu6=False)
        if USE_RES:
            y = y + x2d

        # Scatter lanes back per sample -> NCHW memory order (lane-dense stores).
        for n in range(N):
            o_ref[n] = y[:, n * HW:(n + 1) * HW]

    return kernel


def pack_params(p, N, H, W):
    """One-time parameter packing. Hoisted out of the hot path — call once and cache."""
    HW = H * W
    NHW = N * HW
    f32 = jnp.float32

    def col(v):
        return jnp.asarray(v, f32).reshape(-1, 1)

    ph1 = jnp.concatenate([jnp.asarray(p["w1"], f32),
                           col(p["g1"]), col(p["b1"]),
                           col(p["g2"]), col(p["b2"])], axis=1)       # (HIDDEN, INP+4)
    ph3 = jnp.concatenate([jnp.asarray(p["w3"], f32),
                           col(p["g3"]), col(p["b3"])], axis=1)       # (OUP, HIDDEN+2)

    # Depthwise taps pre-multiplied by the static edge-validity masks and replicated
    # across all N*H*W lanes -> in-kernel they are plain vector loads on idle vld slots.
    lane = jnp.arange(NHW)
    row = (lane % HW) // W
    colp = lane % W
    slabs = []
    for dy in range(3):
        for dx in range(3):
            oy, ox = dy - 1, dx - 1
            valid = ((row + oy >= 0) & (row + oy < H) &
                     (colp + ox >= 0) & (colp + ox < W)).astype(f32)  # (NHW,)
            tap = jnp.asarray(p["wdw"][dy, dx, :], f32)               # (HIDDEN,)
            slabs.append(tap[:, None] * valid[None, :])               # (HIDDEN, NHW)
    dw = jnp.stack(slabs, axis=0)                                     # (9, HIDDEN, NHW)
    return dict(ph1=ph1, dw=dw, ph3=ph3)


@jax.jit
def inverted_residual(x_nchw, packed):
    """x_nchw: (N, INP, H, W) float32 (PyTorch layout).  Returns (N, OUP, H, W)."""
    x = x_nchw.astype(jnp.float32)
    N, cin, H, W = x.shape
    HW = H * W
    NHW = N * HW
    x3 = x.reshape(N, cin, HW)                       # free reshape, no transpose

    kernel = _make_kernel(N, H, W, cin, HIDDEN, OUP)
    vmem = pl.BlockSpec(memory_space=pltpu.MemorySpace.VMEM)
    y = pl.pallas_call(
        kernel,
        out_shape=jax.ShapeDtypeStruct((N, OUP, HW), jnp.float32),
        in_specs=[vmem, vmem, vmem, vmem],
        out_specs=vmem,
        scratch_shapes=[pltpu.VMEM((cin, NHW), jnp.float32)],
    )(x3, packed["ph1"], packed["dw"], packed["ph3"])
    return y.reshape(N, OUP, H, W)                   # free reshape, already NCHW order


def init_params(key):
    """Deterministic synthetic parameters with the shapes implied by __init__."""
    ks = jax.random.split(key, 9)
    f32 = jnp.float32
    # PyTorch weight shapes: (hidden,inp,1,1), (hidden,1,3,3), (oup,hidden,1,1)
    w1 = jax.random.normal(ks[0], (HIDDEN, INP), f32) * (2.0 / INP) ** 0.5
    wdw = jax.random.normal(ks[1], (3, 3, HIDDEN), f32) * (2.0 / 9.0) ** 0.5
    w3 = jax.random.normal(ks[2], (OUP, HIDDEN), f32) * (2.0 / HIDDEN) ** 0.5
    g1 = 1.0 + 0.1 * jax.random.normal(ks[3], (HIDDEN,), f32)
    b1 = 0.1 * jax.random.normal(ks[4], (HIDDEN,), f32)
    g2 = 1.0 + 0.1 * jax.random.normal(ks[5], (HIDDEN,), f32)
    b2 = 0.1 * jax.random.normal(ks[6], (HIDDEN,), f32)
    g3 = 1.0 + 0.1 * jax.random.normal(ks[7], (OUP,), f32)
    b3 = 0.1 * jax.random.normal(ks[8], (OUP,), f32)
    return dict(w1=w1, wdw=wdw, w3=w3, g1=g1, b1=b1, g2=g2, b2=b2, g3=g3, b3=b3)


def reference(x_nchw, p):
    """Pure-JAX reference of the same forward pass (for correctness check)."""
    x = jnp.transpose(x_nchw, (0, 2, 3, 1)).astype(jnp.float32)      # NHWC for convenience
    N, H, W, _ = x.shape

    def bn(h, g, b, relu6):
        mean = jnp.mean(h, axis=(0, 1, 2), keepdims=True)
        var = jnp.mean((h - mean) ** 2, axis=(0, 1, 2), keepdims=True)
        y = (h - mean) * jax.lax.rsqrt(var + BN_EPS)
        y = y * g.reshape(1, 1, 1, -1) + b.reshape(1, 1, 1, -1)
        return jnp.clip(y, 0.0, 6.0) if relu6 else y

    hi = jax.lax.Precision.HIGHEST
    h = jnp.einsum("nhwc,kc->nhwk", x, p["w1"], precision=hi)
    h = bn(h, p["g1"], p["b1"], True)
    hp = jnp.pad(h, ((0, 0), (1, 1), (1, 1), (0, 0)))
    acc = sum(hp[:, dy:dy + H, dx:dx + W, :] * p["wdw"][dy, dx]
              for dy in range(3) for dx in range(3))
    h = bn(acc, p["g2"], p["b2"], True)
    y = jnp.einsum("nhwk,ok->nhwo", h, p["w3"], precision=hi)
    y = bn(y, p["g3"], p["b3"], False)
    if USE_RES:
        y = y + x
    return jnp.transpose(y, (0, 3, 1, 2))


if __name__ == "__main__":
    key = jax.random.PRNGKey(0)
    kx, kp = jax.random.split(key)
    N, H, W = 2, 16, 16
    x = jax.random.normal(kx, (N, INP, H, W), jnp.float32)   # NCHW like PyTorch
    params = init_params(kp)

    # Parameter packing is done ONCE (hoisted out of the forward hot path) and reused.
    packed = pack_params(params, N, H, W)
    packed = jax.tree_util.tree_map(jax.block_until_ready, packed)

    out = inverted_residual(x, packed)
    out = jax.block_until_ready(out)

    assert out.shape == (N, OUP, H, W)
    assert bool(jnp.all(jnp.isfinite(out)))
    ref = reference(x, params)
    err = float(jnp.max(jnp.abs(out - ref)))
    assert jnp.allclose(out, ref, atol=2e-2, rtol=2e-2), err
    print("KERNEL_OK")
</pallas_src>

<mosaic_0001>
module attributes {stable_mosaic.version = 11 : i64} {
  func.func @kernel(%arg0: memref<2x4x256xf32, #tpu.memory_space<vmem>>, %arg1: memref<24x8xf32, #tpu.memory_space<vmem>>, %arg2: memref<9x24x512xf32, #tpu.memory_space<vmem>>, %arg3: memref<4x26xf32, #tpu.memory_space<vmem>>, %arg4: memref<2x4x256xf32, #tpu.memory_space<vmem>>, %arg5: memref<4x512xf32, #tpu.memory_space<vmem>>) attributes {dimension_semantics = [], scalar_prefetch = 0 : i64, scratch_operands = 1 : i64, tpu.core_type = #tpu.core_type<tc>} {
    %c0 = arith.constant 0 : index
    %c0_0 = arith.constant 0 : index
    %c0_1 = arith.constant 0 : index
    %0 = vector.load %arg0[%c0, %c0_0, %c0_1] : memref<2x4x256xf32, #tpu.memory_space<vmem>>, vector<1x4x256xf32>
    %1 = vector.shape_cast %0 : vector<1x4x256xf32> to vector<4x256xf32>
    %c0_2 = arith.constant 0 : index
    %c0_3 = arith.constant 0 : index
    %2 = vector.load %arg5[%c0_2, %c0_3] : memref<4x512xf32, #tpu.memory_space<vmem>>, vector<4x256xf32>
    tpu.vector_store %arg5[%c0_2, %c0_3], %1 {strides = array<i32>} : memref<4x512xf32, #tpu.memory_space<vmem>>, vector<4x256xf32>,
    %c1 = arith.constant 1 : index
    %c0_4 = arith.constant 0 : index
    %c0_5 = arith.constant 0 : index
    %3 = vector.load %arg0[%c1, %c0_4, %c0_5] : memref<2x4x256xf32, #tpu.memory_space<vmem>>, vector<1x4x256xf32>
    %4 = vector.shape_cast %3 : vector<1x4x256xf32> to vector<4x256xf32>
    %c0_6 = arith.constant 0 : index
    %c256 = arith.constant 256 : index
    %5 = vector.load %arg5[%c0_6, %c256] : memref<4x512xf32, #tpu.memory_space<vmem>>, vector<4x256xf32>
    tpu.vector_store %arg5[%c0_6, %c256], %4 {strides = array<i32>} : memref<4x512xf32, #tpu.memory_space<vmem>>, vector<4x256xf32>,
    %c0_7 = arith.constant 0 : index
    %c0_8 = arith.constant 0 : index
    %6 = vector.load %arg5[%c0_7, %c0_8] : memref<4x512xf32, #tpu.memory_space<vmem>>, vector<4x512xf32>
    %c0_9 = arith.constant 0 : index
    %c0_10 = arith.constant 0 : index
    %7 = vector.load %arg1[%c0_9, %c0_10] : memref<24x8xf32, #tpu.memory_space<vmem>>, vector<24x4xf32>
    %c0_11 = arith.constant 0 : index
    %c4 = arith.constant 4 : index
    %8 = vector.load %arg1[%c0_11, %c4] : memref<24x8xf32, #tpu.memory_space<vmem>>, vector<24x1xf32>
    %c0_12 = arith.constant 0 : index
    %c5 = arith.constant 5 : index
    %9 = vector.load %arg1[%c0_12, %c5] : memref<24x8xf32, #tpu.memory_space<vmem>>, vector<24x1xf32>
    %c0_13 = arith.constant 0 : index
    %c6 = arith.constant 6 : index
    %10 = vector.load %arg1[%c0_13, %c6] : memref<24x8xf32, #tpu.memory_space<vmem>>, vector<24x1xf32>
    %c0_14 = arith.constant 0 : index
    %c7 = arith.constant 7 : index
    %11 = vector.load %arg1[%c0_14, %c7] : memref<24x8xf32, #tpu.memory_space<vmem>>, vector<24x1xf32>
    %c0_15 = arith.constant 0 : index
    %c0_16 = arith.constant 0 : index
    %12 = vector.load %arg3[%c0_15, %c0_16] : memref<4x26xf32, #tpu.memory_space<vmem>>, vector<4x24xf32>
    %c0_17 = arith.constant 0 : index
    %c24 = arith.constant 24 : index
    %13 = vector.load %arg3[%c0_17, %c24] : memref<4x26xf32, #tpu.memory_space<vmem>>, vector<4x1xf32>
    %c0_18 = arith.constant 0 : index
    %c25 = arith.constant 25 : index
    %14 = vector.load %arg3[%c0_18, %c25] : memref<4x26xf32, #tpu.memory_space<vmem>>, vector<4x1xf32>
    %cst = arith.constant dense<0.000000e+00> : vector<24x512xf32>
    %15 = tpu.matmul %7, %6, %cst {dimension_numbers = #tpu.dot_dimension_numbers<[1], [0], [0], [1], [0, 0, 1, 1], [], []>} : vector<24x4xf32>, vector<4x512xf32>, vector<24x512xf32> -> vector<24x512xf32>
    %cst_19 = arith.constant dense<0.000000e+00> : vector<24xf32>
    %16 = vector.multi_reduction <add>, %15, %cst_19 [1] : vector<24x512xf32> to vector<24xf32>
    %17 = vector.shape_cast %16 : vector<24xf32> to vector<24x1xf32>
    %18 = arith.mulf %15, %15 : vector<24x512xf32>
    %cst_20 = arith.constant dense<0.000000e+00> : vector<24xf32>
    %19 = vector.multi_reduction <add>, %18, %cst_20 [1] : vector<24x512xf32> to vector<24xf32>
    %20 = vector.shape_cast %19 : vector<24xf32> to vector<24x1xf32>
    %cst_21 = arith.constant 0.001953125 : f32
    %21 = vector.broadcast %cst_21 : f32 to vector<24x1xf32>
    %22 = arith.mulf %17, %21 : vector<24x1xf32>
    %cst_22 = arith.constant 0.001953125 : f32
    %23 = vector.broadcast %cst_22 : f32 to vector<24x1xf32>
    %24 = arith.mulf %20, %23 : vector<24x1xf32>
    %25 = arith.mulf %22, %22 : vector<24x1xf32>
    %26 = arith.subf %24, %25 : vector<24x1xf32>
    %cst_23 = arith.constant 9.99999974E-6 : f32
    %27 = vector.broadcast %cst_23 : f32 to vector<24x1xf32>
    %28 = arith.addf %26, %27 : vector<24x1xf32>
    %29 = math.rsqrt %28 : vector<24x1xf32>
    %30 = arith.mulf %29, %8 : vector<24x1xf32>
    %31 = arith.mulf %22, %30 : vector<24x1xf32>
    %32 = arith.subf %9, %31 : vector<24x1xf32>
    %33 = vector.broadcast %30 : vector<24x1xf32> to vector<24x512xf32>
    %34 = arith.mulf %15, %33 : vector<24x512xf32>
    %35 = vector.broadcast %32 : vector<24x1xf32> to vector<24x512xf32>
    %36 = arith.addf %34, %35 : vector<24x512xf32>
    %cst_24 = arith.constant 0.000000e+00 : f32
    %cst_25 = arith.constant 6.000000e+00 : f32
    %37 = vector.broadcast %cst_24 : f32 to vector<24x512xf32>
    %38 = arith.maximumf %37, %36 : vector<24x512xf32>
    %39 = vector.broadcast %cst_25 : f32 to vector<24x512xf32>
    %40 = arith.minimumf %39, %38 : vector<24x512xf32>
    %c4_26 = arith.constant 4 : index
    %c0_27 = arith.constant 0 : index
    %c0_28 = arith.constant 0 : index
    %41 = vector.load %arg2[%c4_26, %c0_27, %c0_28] : memref<9x24x512xf32, #tpu.memory_space<vmem>>, vector<1x24x512xf32>
    %42 = vector.shape_cast %41 : vector<1x24x512xf32> to vector<24x512xf32>
    %43 = arith.mulf %40, %42 : vector<24x512xf32>
    %c17_i32 = arith.constant 17 : i32
    %44 = tpu.dynamic_rotate %40 by %c17_i32 dim 1 : vector<24x512xf32>, i32 -> vector<24x512xf32>
    %c0_29 = arith.constant 0 : index
    %c0_30 = arith.constant 0 : index
    %c0_31 = arith.constant 0 : index
    %45 = vector.load %arg2[%c0_29, %c0_30, %c0_31] : memref<9x24x512xf32, #tpu.memory_space<vmem>>, vector<1x24x512xf32>
    %46 = vector.shape_cast %45 : vector<1x24x512xf32> to vector<24x512xf32>
    %47 = arith.mulf %44, %46 : vector<24x512xf32>
    %48 = arith.addf %43, %47 : vector<24x512xf32>
    %c16_i32 = arith.constant 16 : i32
    %49 = tpu.dynamic_rotate %40 by %c16_i32 dim 1 : vector<24x512xf32>, i32 -> vector<24x512xf32>
    %c1_32 = arith.constant 1 : index
    %c0_33 = arith.constant 0 : index
    %c0_34 = arith.constant 0 : index
    %50 = vector.load %arg2[%c1_32, %c0_33, %c0_34] : memref<9x24x512xf32, #tpu.memory_space<vmem>>, vector<1x24x512xf32>
    %51 = vector.shape_cast %50 : vector<1x24x512xf32> to vector<24x512xf32>
    %52 = arith.mulf %49, %51 : vector<24x512xf32>
    %53 = arith.addf %48, %52 : vector<24x512xf32>
    %c15_i32 = arith.constant 15 : i32
    %54 = tpu.dynamic_rotate %40 by %c15_i32 dim 1 : vector<24x512xf32>, i32 -> vector<24x512xf32>
    %c2 = arith.constant 2 : index
    %c0_35 = arith.constant 0 : index
    %c0_36 = arith.constant 0 : index
    %55 = vector.load %arg2[%c2, %c0_35, %c0_36] : memref<9x24x512xf32, #tpu.memory_space<vmem>>, vector<1x24x512xf32>
    %56 = vector.shape_cast %55 : vector<1x24x512xf32> to vector<24x512xf32>
    %57 = arith.mulf %54, %56 : vector<24x512xf32>
    %58 = arith.addf %53, %57 : vector<24x512xf32>
    %c1_i32 = arith.constant 1 : i32
    %59 = tpu.dynamic_rotate %40 by %c1_i32 dim 1 : vector<24x512xf32>, i32 -> vector<24x512xf32>
    %c3 = arith.constant 3 : index
    %c0_37 = arith.constant 0 : index
    %c0_38 = arith.constant 0 : index
    %60 = vector.load %arg2[%c3, %c0_37, %c0_38] : memref<9x24x512xf32, #tpu.memory_space<vmem>>, vector<1x24x512xf32>
    %61 = vector.shape_cast %60 : vector<1x24x512xf32> to vector<24x512xf32>
    %62 = arith.mulf %59, %61 : vector<24x512xf32>
    %63 = arith.addf %58, %62 : vector<24x512xf32>
    %c511_i32 = arith.constant 511 : i32
    %64 = tpu.dynamic_rotate %40 by %c511_i32 dim 1 : vector<24x512xf32>, i32 -> vector<24x512xf32>
    %c5_39 = arith.constant 5 : index
    %c0_40 = arith.constant 0 : index
    %c0_41 = arith.constant 0 : index
    %65 = vector.load %arg2[%c5_39, %c0_40, %c0_41] : memref<9x24x512xf32, #tpu.memory_space<vmem>>, vector<1x24x512xf32>
    %66 = vector.shape_cast %65 : vector<1x24x512xf32> to vector<24x512xf32>
    %67 = arith.mulf %64, %66 : vector<24x512xf32>
    %68 = arith.addf %63, %67 : vector<24x512xf32>
    %c497_i32 = arith.constant 497 : i32
    %69 = tpu.dynamic_rotate %40 by %c497_i32 dim 1 : vector<24x512xf32>, i32 -> vector<24x512xf32>
    %c6_42 = arith.constant 6 : index
    %c0_43 = arith.constant 0 : index
    %c0_44 = arith.constant 0 : index
    %70 = vector.load %arg2[%c6_42, %c0_43, %c0_44] : memref<9x24x512xf32, #tpu.memory_space<vmem>>, vector<1x24x512xf32>
    %71 = vector.shape_cast %70 : vector<1x24x512xf32> to vector<24x512xf32>
    %72 = arith.mulf %69, %71 : vector<24x512xf32>
    %73 = arith.addf %68, %72 : vector<24x512xf32>
    %c496_i32 = arith.constant 496 : i32
    %74 = tpu.dynamic_rotate %40 by %c496_i32 dim 1 : vector<24x512xf32>, i32 -> vector<24x512xf32>
    %c7_45 = arith.constant 7 : index
    %c0_46 = arith.constant 0 : index
    %c0_47 = arith.constant 0 : index
    %75 = vector.load %arg2[%c7_45, %c0_46, %c0_47] : memref<9x24x512xf32, #tpu.memory_space<vmem>>, vector<1x24x512xf32>
    %76 = vector.shape_cast %75 : vector<1x24x512xf32> to vector<24x512xf32>
    %77 = arith.mulf %74, %76 : vector<24x512xf32>
    %78 = arith.addf %73, %77 : vector<24x512xf32>
    %c495_i32 = arith.constant 495 : i32
    %79 = tpu.dynamic_rotate %40 by %c495_i32 dim 1 : vector<24x512xf32>, i32 -> vector<24x512xf32>
    %c8 = arith.constant 8 : index
    %c0_48 = arith.constant 0 : index
    %c0_49 = arith.constant 0 : index
    %80 = vector.load %arg2[%c8, %c0_48, %c0_49] : memref<9x24x512xf32, #tpu.memory_space<vmem>>, vector<1x24x512xf32>
    %81 = vector.shape_cast %80 : vector<1x24x512xf32> to vector<24x512xf32>
    %82 = arith.mulf %79, %81 : vector<24x512xf32>
    %83 = arith.addf %78, %82 : vector<24x512xf32>
    %cst_50 = arith.constant dense<0.000000e+00> : vector<24xf32>
    %84 = vector.multi_reduction <add>, %83, %cst_50 [1] : vector<24x512xf32> to vector<24xf32>
    %85 = vector.shape_cast %84 : vector<24xf32> to vector<24x1xf32>
    %86 = arith.mulf %83, %83 : vector<24x512xf32>
    %cst_51 = arith.constant dense<0.000000e+00> : vector<24xf32>
    %87 = vector.multi_reduction <add>, %86, %cst_51 [1] : vector<24x512xf32> to vector<24xf32>
    %88 = vector.shape_cast %87 : vector<24xf32> to vector<24x1xf32>
    %cst_52 = arith.constant 0.001953125 : f32
    %89 = vector.broadcast %cst_52 : f32 to vector<24x1xf32>
    %90 = arith.mulf %85, %89 : vector<24x1xf32>
    %cst_53 = arith.constant 0.001953125 : f32
    %91 = vector.broadcast %cst_53 : f32 to vector<24x1xf32>
    %92 = arith.mulf %88, %91 : vector<24x1xf32>
    %93 = arith.mulf %90, %90 : vector<24x1xf32>
    %94 = arith.subf %92, %93 : vector<24x1xf32>
    %cst_54 = arith.constant 9.99999974E-6 : f32
    %95 = vector.broadcast %cst_54 : f32 to vector<24x1xf32>
    %96 = arith.addf %94, %95 : vector<24x1xf32>
    %97 = math.rsqrt %96 : vector<24x1xf32>
    %98 = arith.mulf %97, %10 : vector<24x1xf32>
    %99 = arith.mulf %90, %98 : vector<24x1xf32>
    %100 = arith.subf %11, %99 : vector<24x1xf32>
    %101 = vector.broadcast %98 : vector<24x1xf32> to vector<24x512xf32>
    %102 = arith.mulf %83, %101 : vector<24x512xf32>
    %103 = vector.broadcast %100 : vector<24x1xf32> to vector<24x512xf32>
    %104 = arith.addf %102, %103 : vector<24x512xf32>
    %cst_55 = arith.constant 0.000000e+00 : f32
    %cst_56 = arith.constant 6.000000e+00 : f32
    %105 = vector.broadcast %cst_55 : f32 to vector<24x512xf32>
    %106 = arith.maximumf %105, %104 : vector<24x512xf32>
    %107 = vector.broadcast %cst_56 : f32 to vector<24x512xf32>
    %108 = arith.minimumf %107, %106 : vector<24x512xf32>
    %cst_57 = arith.constant dense<0.000000e+00> : vector<4x512xf32>
    %109 = tpu.matmul %12, %108, %cst_57 {dimension_numbers = #tpu.dot_dimension_numbers<[1], [0], [0], [1], [0, 0, 1, 1], [], []>} : vector<4x24xf32>, vector<24x512xf32>, vector<4x512xf32> -> vector<4x512xf32>
    %cst_58 = arith.constant dense<0.000000e+00> : vector<4xf32>
    %110 = vector.multi_reduction <add>, %109, %cst_58 [1] : vector<4x512xf32> to vector<4xf32>
    %111 = vector.shape_cast %110 : vector<4xf32> to vector<4x1xf32>
    %112 = arith.mulf %109, %109 : vector<4x512xf32>
    %cst_59 = arith.constant dense<0.000000e+00> : vector<4xf32>
    %113 = vector.multi_reduction <add>, %112, %cst_59 [1] : vector<4x512xf32> to vector<4xf32>
    %114 = vector.shape_cast %113 : vector<4xf32> to vector<4x1xf32>
    %cst_60 = arith.constant 0.001953125 : f32
    %115 = vector.broadcast %cst_60 : f32 to vector<4x1xf32>
    %116 = arith.mulf %111, %115 : vector<4x1xf32>
    %cst_61 = arith.constant 0.001953125 : f32
    %117 = vector.broadcast %cst_61 : f32 to vector<4x1xf32>
    %118 = arith.mulf %114, %117 : vector<4x1xf32>
    %119 = arith.mulf %116, %116 : vector<4x1xf32>
    %120 = arith.subf %118, %119 : vector<4x1xf32>
    %cst_62 = arith.constant 9.99999974E-6 : f32
    %121 = vector.broadcast %cst_62 : f32 to vector<4x1xf32>
    %122 = arith.addf %120, %121 : vector<4x1xf32>
    %123 = math.rsqrt %122 : vector<4x1xf32>
    %124 = arith.mulf %123, %13 : vector<4x1xf32>
    %125 = arith.mulf %116, %124 : vector<4x1xf32>
    %126 = arith.subf %14, %125 : vector<4x1xf32>
    %127 = vector.broadcast %124 : vector<4x1xf32> to vector<4x512xf32>
    %128 = arith.mulf %109, %127 : vector<4x512xf32>
    %129 = vector.broadcast %126 : vector<4x1xf32> to vector<4x512xf32>
    %130 = arith.addf %128, %129 : vector<4x512xf32>
    %131 = arith.addf %130, %6 : vector<4x512xf32>
    %132 = vector.extract_strided_slice %131 {offsets = [0, 0], sizes = [4, 256], strides = [1, 1]} : vector<4x512xf32> to vector<4x256xf32>
    %c0_63 = arith.constant 0 : index
    %c0_64 = arith.constant 0 : index
    %c0_65 = arith.constant 0 : index
    %133 = vector.load %arg4[%c0_63, %c0_64, %c0_65] : memref<2x4x256xf32, #tpu.memory_space<vmem>>, vector<1x4x256xf32>
    %134 = vector.shape_cast %133 : vector<1x4x256xf32> to vector<4x256xf32>
    %135 = vector.shape_cast %132 : vector<4x256xf32> to vector<1x4x256xf32>
    tpu.vector_store %arg4[%c0_63, %c0_64, %c0_65], %135 {strides = array<i32>} : memref<2x4x256xf32, #tpu.memory_space<vmem>>, vector<1x4x256xf32>,
    %136 = vector.extract_strided_slice %131 {offsets = [0, 256], sizes = [4, 256], strides = [1, 1]} : vector<4x512xf32> to vector<4x256xf32>
    %c1_66 = arith.constant 1 : index
    %c0_67 = arith.constant 0 : index
    %c0_68 = arith.constant 0 : index
    %137 = vector.load %arg4[%c1_66, %c0_67, %c0_68] : memref<2x4x256xf32, #tpu.memory_space<vmem>>, vector<1x4x256xf32>
    %138 = vector.shape_cast %137 : vector<1x4x256xf32> to vector<4x256xf32>
    %139 = vector.shape_cast %136 : vector<4x256xf32> to vector<1x4x256xf32>
    tpu.vector_store %arg4[%c1_66, %c0_67, %c0_68], %139 {strides = array<i32>} : memref<2x4x256xf32, #tpu.memory_space<vmem>>, vector<1x4x256xf32>,
    return
  }
}

</mosaic_0001>

<llo_original>
// kernel: inverted_residual.1
$region0: #{inverted_residual.1}
  #allocation0 [shape = 'u32[]', space=smem, size = 0x4, offset = 0x4, fixed_abs, tag = 'smem constant byte address 0x4 - core index']
  #allocation1 [shape = 'u32[72,128]{1,0:T(1,128)}', space=vmem, size = 0x9000, scoped, tag = 'internal scratch']
  #allocation2 [shape = 'f32[4,512]{1,0:T(4,128)}', space=vmem, size = 0x2000, scoped, tag = 'scratch operand']
  %s0 = inlined_call_operand.vmem [shape: f32[2,4,256], index: 0, kind: input, shape index: {}]
  %s1 = inlined_call_operand.vmem [shape: f32[24,8], index: 1, kind: input, shape index: {}]
  %s2 = inlined_call_operand.hbm [shape: f32[9,24,512], index: 2, kind: input, shape index: {}]
  %s3 = inlined_call_operand.vmem [shape: f32[4,26], index: 3, kind: input, shape index: {}]
  %s4 = inlined_call_operand.vmem [shape: f32[2,4,256], index: 4, kind: output, shape index: {}]
  %s5 = sld [smem:[#allocation0]]
  $region30: #{inverted_residual.1} parent=0
    _
  %s7 = ssub.s32 1, %s5
  %s8 = scalar_select 0, %s7, %s5
  $region1: #{inverted_residual.1} parent=0
    #allocation3 [shape = 'u8[442368]{0}', space=vmem, size = 0x6c000, scoped, tag = 'input window, operand 2, single buffered']
    #allocation4 [shape = 's32[1]{0}', space=sflag, size = 0x4, scoped, tag = 'scoped memory for inverted_residual.1']
    %9 = vsyncpa [#allocation4], 0
    // Predicated region
    $region2: #{inverted_residual.1} parent=1 // pred_check
      _
    $region3: #{inverted_residual.1} parent=1 // pred_check_branch
      %11 = sbr.rel (0) target = $region5
    $region4: #{inverted_residual.1} parent=1 // pred_region
      _
    $region5: #{inverted_residual.1} parent=1 // pred_fallthru
      _
    // Predicated region
    $region6: #{inverted_residual.1} parent=1 // pred_check
      _
    $region7: #{inverted_residual.1} parent=1 // pred_check_branch
      %13 = sbr.rel (0) target = $region9
    $region8: #{inverted_residual.1} parent=1 // pred_region
      _
    $region9: #{inverted_residual.1} parent=1 // pred_fallthru
      _
    // Predicated region
    $region10: #{inverted_residual.1} parent=1 // pred_check
      _
    $region11: #{inverted_residual.1} parent=1 // pred_check_branch
      %15 = sbr.rel (0) target = $region13
    $region12: #{inverted_residual.1} parent=1 // pred_region
      %17 = vsyncadd [#allocation4], 0
      %s18 = sshll.u32 %s2, 4
      %s19 = int_to_ptr.hbm [resolvable:$true] %s18
      %s20 = sshll.u32 [#allocation3], 4
      %s21 = int_to_ptr.vmem [resolvable:$true] %s20
      %26 = dma.hbm_to_vmem [thread:$0]  %s19, 13824, %s21, [#allocation4], 512, 512, 32
    $region13: #{inverted_residual.1} parent=1 // pred_fallthru
      _
    // Predicated region
    $region14: #{inverted_residual.1} parent=1 // pred_check
      _
    $region15: #{inverted_residual.1} parent=1 // pred_check_branch
      %28 = sbr.rel (0) target = $region17
    $region16: #{inverted_residual.1} parent=1 // pred_region
      _
    $region17: #{inverted_residual.1} parent=1 // pred_fallthru
      _
    // Predicated region
    $region18: #{inverted_residual.1} parent=1 // pred_check
      _
    $region19: #{inverted_residual.1} parent=1 // pred_check_branch
      %30 = sbr.rel (0) target = $region21
    $region20: #{inverted_residual.1} parent=1 // pred_region
      %32 = dma.done [#allocation4], 13824
    $region21: #{inverted_residual.1} parent=1 // pred_fallthru
      _
    %v33 = vld [vmem:[%s0] sm:$0xff]
    %34 = vst [vmem:[#allocation2] sm:$0xff] %v33
    %s35 = scalar_lea.vmem %s0, 8
    %v36 = vld [vmem:[%s35] sm:$0xff]
    %37 = vst [vmem:[#allocation2 + $0x8] sm:$0xff] %v36
    %v38 = vld [vmem:[#allocation2] sm:$0xff]
    %v39 = vld [vmem:[#allocation2 + $0x8] sm:$0xff]
    %v40 = vld [vmem:[%s1] sm:$0xff]
    %v41 = vld [vmem:[%s1 + $0x8] sm:$0xff]
    %v42 = vld [vmem:[%s1 + $0x10] sm:$0xff]
    %v43 = vld [vmem:[%s3] sm:$0xf]
    %46 = vst [vmem:[#allocation1] ss:$2 sm:$0xff] %v38
    %s47 = scalar_lea.vmem [#allocation1], 16
    %48 = vst [vmem:[%s47] ss:$2 sm:$0xff] %v39
    %v49 = vld.sshfl [vmem:[#allocation1] sm:$0xff pattern:$0x75316420]
    %v50 = vld.sshfl [vmem:[#allocation1 + $0x8] sm:$0xff pattern:$0x75316420]
    %v51 = vld.sshfl [vmem:[#allocation1 + $0x10] sm:$0xff pattern:$0x75316420]
    %v52 = vld.sshfl [vmem:[#allocation1 + $0x18] sm:$0xff pattern:$0x75316420]
    %vm53 = vcmask 31744
    %v55 = vsel %vm53, %v40, 0
    %v58 = vsel %vm53, %v41, 0
    %v61 = vsel %vm53, %v42, 0
    %vm63 = vcmask 1043456
    %v64 = vsel %vm63, %v49, 0
    %v66 = vsel %vm63, %v50, 0
    %v68 = vsel %vm63, %v51, 0
    %v70 = vsel %vm63, %v52, 0
    %72 = vmatpush.msra.mxu0 0.0
    %73 = vmatpush.msra.mxu0 0.0
    %74 = vmatpush.msra.mxu0 0.0
    %75 = vmatpush.msra.mxu0 0.0
    %76 = vmatpush.msra.mxu0 0.0
    %77 = vmatpush.msra.mxu0 0.0
    %78 = vmatpush.msra.mxu0 0.0
    %79 = vmatpush.msra.mxu0 0.0
    %80 = vmatpush.msra.mxu0 0.0
    %81 = vmatpush.msra.mxu0 0.0
    %82 = vmatpush.msra.mxu0 0.0
    %83 = vmatpush.msra.mxu0 0.0
    %84 = vmatpush.msra.mxu0 0.0
    %85 = vmatpush.msra.mxu0 0.0
    %86 = vmatpush.msra.mxu0 0.0
    %87 = vmatpush.msra.mxu0 %v64
    %88 = vmatmul.f32.gmra.mxu0 %v55
    %v89 = vpop.f32.mrf.mxu0
    %v90 = vadd.f32 0.0, %v89
    %91 = vmatmul.f32.gmra.mxu0 %v58
    %v92 = vpop.f32.mrf.mxu0
    %v93 = vadd.f32 0.0, %v92
    %94 = vmatmul.f32.gmra.mxu0 %v61
    %v95 = vpop.f32.mrf.mxu0
    %v96 = vadd.f32 0.0, %v95
    %97 = vdwg.mxu0
    %98 = vmatpush.msra.mxu0 0.0
    %99 = vmatpush.msra.mxu0 0.0
    %100 = vmatpush.msra.mxu0 0.0
    %101 = vmatpush.msra.mxu0 0.0
    %102 = vmatpush.msra.mxu0 0.0
    %103 = vmatpush.msra.mxu0 0.0
    %104 = vmatpush.msra.mxu0 0.0
    %105 = vmatpush.msra.mxu0 0.0
    %106 = vmatpush.msra.mxu0 0.0
    %107 = vmatpush.msra.mxu0 0.0
    %108 = vmatpush.msra.mxu0 0.0
    %109 = vmatpush.msra.mxu0 0.0
    %110 = vmatpush.msra.mxu0 0.0
    %111 = vmatpush.msra.mxu0 0.0
    %112 = vmatpush.msra.mxu0 0.0
    %113 = vmatpush.msra.mxu0 %v66
    %114 = vmatmul.f32.gmra.mxu0 %v55
    %v115 = vpop.f32.mrf.mxu0
    %v116 = vadd.f32 0.0, %v115
    %117 = vmatmul.f32.gmra.mxu0 %v58
    %v118 = vpop.f32.mrf.mxu0
    %v119 = vadd.f32 0.0, %v118
    %120 = vmatmul.f32.gmra.mxu0 %v61
    %v121 = vpop.f32.mrf.mxu0
    %v122 = vadd.f32 0.0, %v121
    %123 = vdwg.mxu0
    %124 = vmatpush.msra.mxu0 0.0
    %125 = vmatpush.msra.mxu0 0.0
    %126 = vmatpush.msra.mxu0 0.0
    %127 = vmatpush.msra.mxu0 0.0
    %128 = vmatpush.msra.mxu0 0.0
    %129 = vmatpush.msra.mxu0 0.0
    %130 = vmatpush.msra.mxu0 0.0
    %131 = vmatpush.msra.mxu0 0.0
    %132 = vmatpush.msra.mxu0 0.0
    %133 = vmatpush.msra.mxu0 0.0
    %134 = vmatpush.msra.mxu0 0.0
    %135 = vmatpush.msra.mxu0 0.0
    %136 = vmatpush.msra.mxu0 0.0
    %137 = vmatpush.msra.mxu0 0.0
    %138 = vmatpush.msra.mxu0 0.0
    %139 = vmatpush.msra.mxu0 %v68
    %140 = vmatmul.f32.gmra.mxu0 %v55
    %v141 = vpop.f32.mrf.mxu0
    %v142 = vadd.f32 0.0, %v141
    %143 = vmatmul.f32.gmra.mxu0 %v58
    %v144 = vpop.f32.mrf.mxu0
    %v145 = vadd.f32 0.0, %v144
    %146 = vmatmul.f32.gmra.mxu0 %v61
    %v147 = vpop.f32.mrf.mxu0
    %v148 = vadd.f32 0.0, %v147
    %149 = vdwg.mxu0
    %150 = vmatpush.msra.mxu0 0.0
    %151 = vmatpush.msra.mxu0 0.0
    %152 = vmatpush.msra.mxu0 0.0
    %153 = vmatpush.msra.mxu0 0.0
    %154 = vmatpush.msra.mxu0 0.0
    %155 = vmatpush.msra.mxu0 0.0
    %156 = vmatpush.msra.mxu0 0.0
    %157 = vmatpush.msra.mxu0 0.0
    %158 = vmatpush.msra.mxu0 0.0
    %159 = vmatpush.msra.mxu0 0.0
    %160 = vmatpush.msra.mxu0 0.0
    %161 = vmatpush.msra.mxu0 0.0
    %162 = vmatpush.msra.mxu0 0.0
    %163 = vmatpush.msra.mxu0 0.0
    %164 = vmatpush.msra.mxu0 0.0
    %165 = vmatpush.msra.mxu0 %v70
    %166 = vmatmul.f32.gmra.mxu0 %v55
    %v167 = vpop.f32.mrf.mxu0
    %v168 = vadd.f32 0.0, %v167
    %169 = vmatmul.f32.gmra.mxu0 %v58
    %v170 = vpop.f32.mrf.mxu0
    %v171 = vadd.f32 0.0, %v170
    %172 = vmatmul.f32.gmra.mxu0 %v61
    %v173 = vpop.f32.mrf.mxu0
    %v174 = vadd.f32 0.0, %v173
    %175 = vdwg.mxu0
    %v176 = vadd.f32 %v90, %v116
    %v177 = vadd.f32 %v176, %v142
    %v178 = vadd.f32 %v177, %v168
    %179 = vadd.xlane.f32.xlu0 %v178
    %v180 = vpop.xlane.xlu0 %179
    %v181 = vadd.f32 %v93, %v119
    %v182 = vadd.f32 %v181, %v145
    %v183 = vadd.f32 %v182, %v171
    %184 = vadd.xlane.f32.xlu0 %v183
    %v185 = vpop.xlane.xlu0 %184
    %v186 = vadd.f32 %v96, %v122
    %v187 = vadd.f32 %v186, %v148
    %v188 = vadd.f32 %v187, %v174
    %189 = vadd.xlane.f32.xlu0 %v188
    %v190 = vpop.xlane.xlu0 %189
    %v191 = vmul.f32 %v90, %v90
    %v192 = vmul.f32 %v116, %v116
    %v193 = vmul.f32 %v142, %v142
    %v194 = vmul.f32 %v168, %v168
    %v195 = vmul.f32 %v93, %v93
    %v196 = vmul.f32 %v119, %v119
    %v197 = vmul.f32 %v145, %v145
    %v198 = vmul.f32 %v171, %v171
    %v199 = vmul.f32 %v96, %v96
    %v200 = vmul.f32 %v122, %v122
    %v201 = vmul.f32 %v148, %v148
    %v202 = vmul.f32 %v174, %v174
    %v203 = vadd.f32 %v191, %v192
    %v204 = vadd.f32 %v203, %v193
    %v205 = vadd.f32 %v204, %v194
    %206 = vadd.xlane.f32.xlu0 %v205
    %v207 = vpop.xlane.xlu0 %206
    %v208 = vadd.f32 %v195, %v196
    %v209 = vadd.f32 %v208, %v197
    %v210 = vadd.f32 %v209, %v198
    %211 = vadd.xlane.f32.xlu0 %v210
    %v212 = vpop.xlane.xlu0 %211
    %v213 = vadd.f32 %v199, %v200
    %v214 = vadd.f32 %v213, %v201
    %v215 = vadd.f32 %v214, %v202
    %216 = vadd.xlane.f32.xlu0 %v215
    %v217 = vpop.xlane.xlu0 %216
    %v218 = vmul.f32 %v180, 0.001953125
    %v219 = vmul.f32 %v185, 0.001953125
    %v220 = vmul.f32 %v190, 0.001953125
    %v221 = vmul.f32 %v207, 0.001953125
    %v222 = vmul.f32 %v212, 0.001953125
    %v223 = vmul.f32 %v217, 0.001953125
    %v224 = vmul.f32 %v218, %v218
    %v225 = vmul.f32 %v219, %v219
    %v226 = vmul.f32 %v220, %v220
    %v227 = vsub.f32 %v221, %v224
    %v228 = vsub.f32 %v222, %v225
    %v229 = vsub.f32 %v223, %v226
    %v230 = vadd.f32 %v227, 1e-05
    %v231 = vadd.f32 %v228, 1e-05
    %v232 = vadd.f32 %v229, 1e-05
    %v233 = vrsqrt.pop %v230
    %v234 = vmul.f32 %v233, %v230
    %v235 = vmul.f32 %v234, %v233
    %v236 = vmul.f32 0.5, %v235
    %v237 = vsub.f32 1.5, %v236
    %v238 = vmul.f32 %v233, %v237
    %vm239 = vweird.f32 %v230
    %vm240 = vweird.f32 %v233
    %vm241 = vmor %vm239, %vm240
    %v242 = vsel %vm241, %v233, %v238
    %v243 = vrsqrt.pop %v231
    %v244 = vmul.f32 %v243, %v231
    %v245 = vmul.f32 %v244, %v243
    %v246 = vmul.f32 0.5, %v245
    %v247 = vsub.f32 1.5, %v246
    %v248 = vmul.f32 %v243, %v247
    %vm249 = vweird.f32 %v231
    %vm250 = vweird.f32 %v243
    %vm251 = vmor %vm249, %vm250
    %v252 = vsel %vm251, %v243, %v248
    %v253 = vrsqrt.pop %v232
    %v254 = vmul.f32 %v253, %v232
    %v255 = vmul.f32 %v254, %v253
    %v256 = vmul.f32 0.5, %v255
    %v257 = vsub.f32 1.5, %v256
    %v258 = vmul.f32 %v253, %v257
    %vm259 = vweird.f32 %v232
    %vm260 = vweird.f32 %v253
    %vm261 = vmor %vm259, %vm260
    %v262 = vsel %vm261, %v253, %v258
    %v263 = vmul.f32 %v242, %v40
    %v264 = vmul.f32 %v252, %v41
    %v265 = vmul.f32 %v262, %v42
    %v266 = vmul.f32 %v218, %v263
    %v267 = vmul.f32 %v219, %v264
    %v268 = vmul.f32 %v220, %v265
    %272 = vrot.lane.b32.xlu0 %v266, 1
    %v273 = vpop.permute.xlu0 %272
    %274 = vrot.lane.b32.xlu0 %v267, 1
    %v275 = vpop.permute.xlu0 %274
    %276 = vrot.lane.b32.xlu0 %v268, 1
    %v277 = vpop.permute.xlu0 %276
    %v281 = vsub.f32 %v40, %v273
    %v282 = vsub.f32 %v41, %v275
    %v283 = vsub.f32 %v42, %v277
    %285 = vset.pattern.permute.xlu0 4
    %286 = vperm.xlu0 %285, %v263
    %v287 = vpop.permute.xlu0 %286
    %290 = vset.pattern.permute.xlu0 4
    %291 = vperm.xlu0 %290, %v264
    %v292 = vpop.permute.xlu0 %291
    %295 = vset.pattern.permute.xlu0 4
    %296 = vperm.xlu0 %295, %v265
    %v297 = vpop.permute.xlu0 %296
    %v299 = vmul.f32 %v90, %v287
    %v300 = vmul.f32 %v116, %v287
    %v301 = vmul.f32 %v142, %v287
    %v302 = vmul.f32 %v168, %v287
    %v303 = vmul.f32 %v93, %v292
    %v304 = vmul.f32 %v119, %v292
    %v305 = vmul.f32 %v145, %v292
    %v306 = vmul.f32 %v171, %v292
    %v307 = vmul.f32 %v96, %v297
    %v308 = vmul.f32 %v122, %v297
    %v309 = vmul.f32 %v148, %v297
    %v310 = vmul.f32 %v174, %v297
    %312 = vset.pattern.permute.xlu0 5
    %313 = vperm.xlu0 %312, %v281
    %v314 = vpop.permute.xlu0 %313
    %317 = vset.pattern.permute.xlu0 5
    %318 = vperm.xlu0 %317, %v282
    %v319 = vpop.permute.xlu0 %318
    %322 = vset.pattern.permute.xlu0 5
    %323 = vperm.xlu0 %322, %v283
    %v324 = vpop.permute.xlu0 %323
    %v326 = vadd.f32 %v299, %v314
    %v327 = vadd.f32 %v300, %v314
    %v328 = vadd.f32 %v301, %v314
    %v329 = vadd.f32 %v302, %v314
    %v330 = vadd.f32 %v303, %v319
    %v331 = vadd.f32 %v304, %v319
    %v332 = vadd.f32 %v305, %v319
    %v333 = vadd.f32 %v306, %v319
    %v334 = vadd.f32 %v307, %v324
    %v335 = vadd.f32 %v308, %v324
    %v336 = vadd.f32 %v309, %v324
    %v337 = vadd.f32 %v310, %v324
    %v338 = vmax.f32 %v326, 0.0
    %v339 = vmax.f32 %v327, 0.0
    %v340 = vmax.f32 %v328, 0.0
    %v341 = vmax.f32 %v329, 0.0
    %v342 = vmax.f32 %v330, 0.0
    %v343 = vmax.f32 %v331, 0.0
    %v344 = vmax.f32 %v332, 0.0
    %v345 = vmax.f32 %v333, 0.0
    %v346 = vmax.f32 %v334, 0.0
    %v347 = vmax.f32 %v335, 0.0
    %v348 = vmax.f32 %v336, 0.0
    %v349 = vmax.f32 %v337, 0.0
    %v350 = vmin.f32 %v338, 6.0
    %v351 = vmin.f32 %v339, 6.0
    %v352 = vmin.f32 %v340, 6.0
    %v353 = vmin.f32 %v341, 6.0
    %v354 = vmin.f32 %v342, 6.0
    %v355 = vmin.f32 %v343, 6.0
    %v356 = vmin.f32 %v344, 6.0
    %v357 = vmin.f32 %v345, 6.0
    %v358 = vmin.f32 %v346, 6.0
    %v359 = vmin.f32 %v347, 6.0
    %v360 = vmin.f32 %v348, 6.0
    %v361 = vmin.f32 %v349, 6.0
    %s362 = scalar_lea.vmem [#allocation3], 384
    %v363 = vld [vmem:[%s362] sm:$0xff]
    %v364 = vld [vmem:[%s362 + $0x8] sm:$0xff]
    %v365 = vld [vmem:[%s362 + $0x10] sm:$0xff]
    %v366 = vld [vmem:[%s362 + $0x18] sm:$0xff]
    %v367 = vld [vmem:[%s362 + $0x20] sm:$0xff]
    %v368 = vld [vmem:[%s362 + $0x28] sm:$0xff]
    %v369 = vld [vmem:[%s362 + $0x30] sm:$0xff]
    %v370 = vld [vmem:[%s362 + $0x38] sm:$0xff]
    %v371 = vld [vmem:[%s362 + $0x40] sm:$0xff]
    %v372 = vld [vmem:[%s362 + $0x48] sm:$0xff]
    %v373 = vld [vmem:[%s362 + $0x50] sm:$0xff]
    %v374 = vld [vmem:[%s362 + $0x58] sm:$0xff]
    %v375 = vmul.f32 %v350, %v363
    %v376 = vmul.f32 %v351, %v364
    %v377 = vmul.f32 %v352, %v365
    %v378 = vmul.f32 %v353, %v366
    %v379 = vmul.f32 %v354, %v367
    %v380 = vmul.f32 %v355, %v368
    %v381 = vmul.f32 %v356, %v369
    %v382 = vmul.f32 %v357, %v370
    %v383 = vmul.f32 %v358, %v371
    %v384 = vmul.f32 %v359, %v372
    %v385 = vmul.f32 %v360, %v373
    %v386 = vmul.f32 %v361, %v374
    %387 = vrot.lane.b32.xlu0 %v350, 17
    %v388 = vpop.permute.xlu0 %387
    %389 = vrot.lane.b32.xlu0 %v354, 17
    %v390 = vpop.permute.xlu0 %389
    %391 = vrot.lane.b32.xlu0 %v358, 17
    %v392 = vpop.permute.xlu0 %391
    %393 = vrot.lane.b32.xlu0 %v351, 17
    %v394 = vpop.permute.xlu0 %393
    %395 = vrot.lane.b32.xlu0 %v355, 17
    %v396 = vpop.permute.xlu0 %395
    %397 = vrot.lane.b32.xlu0 %v359, 17
    %v398 = vpop.permute.xlu0 %397
    %399 = vrot.lane.b32.xlu0 %v352, 17
    %v400 = vpop.permute.xlu0 %399
    %401 = vrot.lane.b32.xlu0 %v356, 17
    %v402 = vpop.permute.xlu0 %401
    %403 = vrot.lane.b32.xlu0 %v360, 17
    %v404 = vpop.permute.xlu0 %403
    %405 = vrot.lane.b32.xlu0 %v353, 17
    %v406 = vpop.permute.xlu0 %405
    %407 = vrot.lane.b32.xlu0 %v357, 17
    %v408 = vpop.permute.xlu0 %407
    %409 = vrot.lane.b32.xlu0 %v361, 17
    %v410 = vpop.permute.xlu0 %409
    %v411 = vlaneseq
    %v412 = vand.u32 %v411, 127
    %vm413 = vcmp.lt.s32.totalorder %v412, 17
    %v414 = vsel %vm413, %v400, %v406
    %v415 = vsel %vm413, %v402, %v408
    %v416 = vsel %vm413, %v404, %v410
    %v417 = vsel %vm413, %v394, %v400
    %v418 = vsel %vm413, %v396, %v402
    %v419 = vsel %vm413, %v398, %v404
    %v420 = vsel %vm413, %v388, %v394
    %v421 = vsel %vm413, %v390, %v396
    %v422 = vsel %vm413, %v392, %v398
    %v423 = vsel %vm413, %v406, %v388
    %v424 = vsel %vm413, %v408, %v390
    %v425 = vsel %vm413, %v410, %v392
    %v426 = vld [vmem:[#allocation3] sm:$0xff]
    %v427 = vld [vmem:[#allocation3 + $0x8] sm:$0xff]
    %v428 = vld [vmem:[#allocation3 + $0x10] sm:$0xff]
    %v429 = vld [vmem:[#allocation3 + $0x18] sm:$0xff]
    %v430 = vld [vmem:[#allocation3 + $0x20] sm:$0xff]
    %v431 = vld [vmem:[#allocation3 + $0x28] sm:$0xff]
    %v432 = vld [vmem:[#allocation3 + $0x30] sm:$0xff]
    %v433 = vld [vmem:[#allocation3 + $0x38] sm:$0xff]
    %v434 = vld [vmem:[#allocation3 + $0x40] sm:$0xff]
    %v435 = vld [vmem:[#allocation3 + $0x48] sm:$0xff]
    %v436 = vld [vmem:[#allocation3 + $0x50] sm:$0xff]
    %v437 = vld [vmem:[#allocation3 + $0x58] sm:$0xff]
    %v438 = vmul.f32 %v423, %v426
    %v439 = vmul.f32 %v420, %v427
    %v440 = vmul.f32 %v417, %v428
    %v441 = vmul.f32 %v414, %v429
    %v442 = vmul.f32 %v424, %v430
    %v443 = vmul.f32 %v421, %v431
    %v444 = vmul.f32 %v418, %v432
    %v445 = vmul.f32 %v415, %v433
    %v446 = vmul.f32 %v425, %v434
    %v447 = vmul.f32 %v422, %v435
    %v448 = vmul.f32 %v419, %v436
    %v449 = vmul.f32 %v416, %v437
    %v450 = vadd.f32 %v375, %v438
    %v451 = vadd.f32 %v376, %v439
    %v452 = vadd.f32 %v377, %v440
    %v453 = vadd.f32 %v378, %v441
    %v454 = vadd.f32 %v379, %v442
    %v455 = vadd.f32 %v380, %v443
    %v456 = vadd.f32 %v381, %v444
    %v457 = vadd.f32 %v382, %v445
    %v458 = vadd.f32 %v383, %v446
    %v459 = vadd.f32 %v384, %v447
    %v460 = vadd.f32 %v385, %v448
    %v461 = vadd.f32 %v386, %v449
    %462 = vrot.lane.b32.xlu0 %v350, 16
    %v463 = vpop.permute.xlu0 %462
    %464 = vrot.lane.b32.xlu0 %v354, 16
    %v465 = vpop.permute.xlu0 %464
    %466 = vrot.lane.b32.xlu0 %v358, 16
    %v467 = vpop.permute.xlu0 %466
    %468 = vrot.lane.b32.xlu0 %v351, 16
    %v469 = vpop.permute.xlu0 %468
    %470 = vrot.lane.b32.xlu0 %v355, 16
    %v471 = vpop.permute.xlu0 %470
    %472 = vrot.lane.b32.xlu0 %v359, 16
    %v473 = vpop.permute.xlu0 %472
    %474 = vrot.lane.b32.xlu0 %v352, 16
    %v475 = vpop.permute.xlu0 %474
    %476 = vrot.lane.b32.xlu0 %v356, 16
    %v477 = vpop.permute.xlu0 %476
    %478 = vrot.lane.b32.xlu0 %v360, 16
    %v479 = vpop.permute.xlu0 %478
    %480 = vrot.lane.b32.xlu0 %v353, 16
    %v481 = vpop.permute.xlu0 %480
    %482 = vrot.lane.b32.xlu0 %v357, 16
    %v483 = vpop.permute.xlu0 %482
    %484 = vrot.lane.b32.xlu0 %v361, 16
    %v485 = vpop.permute.xlu0 %484
    %vm486 = vcmp.lt.s32.totalorder %v412, 16
    %v487 = vsel %vm486, %v475, %v481
    %v488 = vsel %vm486, %v477, %v483
    %v489 = vsel %vm486, %v479, %v485
    %v490 = vsel %vm486, %v469, %v475
    %v491 = vsel %vm486, %v471, %v477
    %v492 = vsel %vm486, %v473, %v479
    %v493 = vsel %vm486, %v463, %v469
    %v494 = vsel %vm486, %v465, %v471
    %v495 = vsel %vm486, %v467, %v473
    %v496 = vsel %vm486, %v481, %v463
    %v497 = vsel %vm486, %v483, %v465
    %v498 = vsel %vm486, %v485, %v467
    %s499 = scalar_lea.vmem [#allocation3], 96
    %v500 = vld [vmem:[%s499] sm:$0xff]
    %v501 = vld [vmem:[%s499 + $0x8] sm:$0xff]
    %v502 = vld [vmem:[%s499 + $0x10] sm:$0xff]
    %v503 = vld [vmem:[%s499 + $0x18] sm:$0xff]
    %v504 = vld [vmem:[%s499 + $0x20] sm:$0xff]
    %v505 = vld [vmem:[%s499 + $0x28] sm:$0xff]
    %v506 = vld [vmem:[%s499 + $0x30] sm:$0xff]
    %v507 = vld [vmem:[%s499 + $0x38] sm:$0xff]
    %v508 = vld [vmem:[%s499 + $0x40] sm:$0xff]
    %v509 = vld [vmem:[%s499 + $0x48] sm:$0xff]
    %v510 = vld [vmem:[%s499 + $0x50] sm:$0xff]
    %v511 = vld [vmem:[%s499 + $0x58] sm:$0xff]
    %v512 = vmul.f32 %v496, %v500
    %v513 = vmul.f32 %v493, %v501
    %v514 = vmul.f32 %v490, %v502
    %v515 = vmul.f32 %v487, %v503
    %v516 = vmul.f32 %v497, %v504
    %v517 = vmul.f32 %v494, %v505
    %v518 = vmul.f32 %v491, %v506
    %v519 = vmul.f32 %v488, %v507
    %v520 = vmul.f32 %v498, %v508
    %v521 = vmul.f32 %v495, %v509
    %v522 = vmul.f32 %v492, %v510
    %v523 = vmul.f32 %v489, %v511
    %v524 = vadd.f32 %v450, %v512
    %v525 = vadd.f32 %v451, %v513
    %v526 = vadd.f32 %v452, %v514
    %v527 = vadd.f32 %v453, %v515
    %v528 = vadd.f32 %v454, %v516
    %v529 = vadd.f32 %v455, %v517
    %v530 = vadd.f32 %v456, %v518
    %v531 = vadd.f32 %v457, %v519
    %v532 = vadd.f32 %v458, %v520
    %v533 = vadd.f32 %v459, %v521
    %v534 = vadd.f32 %v460, %v522
    %v535 = vadd.f32 %v461, %v523
    %536 = vrot.lane.b32.xlu0 %v350, 15
    %v537 = vpop.permute.xlu0 %536
    %538 = vrot.lane.b32.xlu0 %v354, 15
    %v539 = vpop.permute.xlu0 %538
    %540 = vrot.lane.b32.xlu0 %v358, 15
    %v541 = vpop.permute.xlu0 %540
    %542 = vrot.lane.b32.xlu0 %v351, 15
    %v543 = vpop.permute.xlu0 %542
    %544 = vrot.lane.b32.xlu0 %v355, 15
    %v545 = vpop.permute.xlu0 %544
    %546 = vrot.lane.b32.xlu0 %v359, 15
    %v547 = vpop.permute.xlu0 %546
    %548 = vrot.lane.b32.xlu0 %v352, 15
    %v549 = vpop.permute.xlu0 %548
    %550 = vrot.lane.b32.xlu0 %v356, 15
    %v551 = vpop.permute.xlu0 %550
    %552 = vrot.lane.b32.xlu0 %v360, 15
    %v553 = vpop.permute.xlu0 %552
    %554 = vrot.lane.b32.xlu0 %v353, 15
    %v555 = vpop.permute.xlu0 %554
    %556 = vrot.lane.b32.xlu0 %v357, 15
    %v557 = vpop.permute.xlu0 %556
    %558 = vrot.lane.b32.xlu0 %v361, 15
    %v559 = vpop.permute.xlu0 %558
    %vm560 = vcmp.lt.s32.totalorder %v412, 15
    %v561 = vsel %vm560, %v549, %v555
    %v562 = vsel %vm560, %v551, %v557
    %v563 = vsel %vm560, %v553, %v559
    %v564 = vsel %vm560, %v543, %v549
    %v565 = vsel %vm560, %v545, %v551
    %v566 = vsel %vm560, %v547, %v553
    %v567 = vsel %vm560, %v537, %v543
    %v568 = vsel %vm560, %v539, %v545
    %v569 = vsel %vm560, %v541, %v547
    %v570 = vsel %vm560, %v555, %v537
    %v571 = vsel %vm560, %v557, %v539
    %v572 = vsel %vm560, %v559, %v541
    %s573 = scalar_lea.vmem [#allocation3], 192
    %v574 = vld [vmem:[%s573] sm:$0xff]
    %v575 = vld [vmem:[%s573 + $0x8] sm:$0xff]
    %v576 = vld [vmem:[%s573 + $0x10] sm:$0xff]
    %v577 = vld [vmem:[%s573 + $0x18] sm:$0xff]
    %v578 = vld [vmem:[%s573 + $0x20] sm:$0xff]
    %v579 = vld [vmem:[%s573 + $0x28] sm:$0xff]
    %v580 = vld [vmem:[%s573 + $0x30] sm:$0xff]
    %v581 = vld [vmem:[%s573 + $0x38] sm:$0xff]
    %v582 = vld [vmem:[%s573 + $0x40] sm:$0xff]
    %v583 = vld [vmem:[%s573 + $0x48] sm:$0xff]
    %v584 = vld [vmem:[%s573 + $0x50] sm:$0xff]
    %v585 = vld [vmem:[%s573 + $0x58] sm:$0xff]
    %v586 = vmul.f32 %v570, %v574
    %v587 = vmul.f32 %v567, %v575
    %v588 = vmul.f32 %v564, %v576
    %v589 = vmul.f32 %v561, %v577
    %v590 = vmul.f32 %v571, %v578
    %v591 = vmul.f32 %v568, %v579
    %v592 = vmul.f32 %v565, %v580
    %v593 = vmul.f32 %v562, %v581
    %v594 = vmul.f32 %v572, %v582
    %v595 = vmul.f32 %v569, %v583
    %v596 = vmul.f32 %v566, %v584
    %v597 = vmul.f32 %v563, %v585
    %v598 = vadd.f32 %v524, %v586
    %v599 = vadd.f32 %v525, %v587
    %v600 = vadd.f32 %v526, %v588
    %v601 = vadd.f32 %v527, %v589
    %v602 = vadd.f32 %v528, %v590
    %v603 = vadd.f32 %v529, %v591
    %v604 = vadd.f32 %v530, %v592
    %v605 = vadd.f32 %v531, %v593
    %v606 = vadd.f32 %v532, %v594
    %v607 = vadd.f32 %v533, %v595
    %v608 = vadd.f32 %v534, %v596
    %v609 = vadd.f32 %v535, %v597
    %610 = vrot.lane.b32.xlu0 %v350, 1
    %v611 = vpop.permute.xlu0 %610
    %612 = vrot.lane.b32.xlu0 %v354, 1
    %v613 = vpop.permute.xlu0 %612
    %614 = vrot.lane.b32.xlu0 %v358, 1
    %v615 = vpop.permute.xlu0 %614
    %616 = vrot.lane.b32.xlu0 %v351, 1
    %v617 = vpop.permute.xlu0 %616
    %618 = vrot.lane.b32.xlu0 %v355, 1
    %v619 = vpop.permute.xlu0 %618
    %620 = vrot.lane.b32.xlu0 %v359, 1
    %v621 = vpop.permute.xlu0 %620
    %622 = vrot.lane.b32.xlu0 %v352, 1
    %v623 = vpop.permute.xlu0 %622
    %624 = vrot.lane.b32.xlu0 %v356, 1
    %v625 = vpop.permute.xlu0 %624
    %626 = vrot.lane.b32.xlu0 %v360, 1
    %v627 = vpop.permute.xlu0 %626
    %628 = vrot.lane.b32.xlu0 %v353, 1
    %v629 = vpop.permute.xlu0 %628
    %630 = vrot.lane.b32.xlu0 %v357, 1
    %v631 = vpop.permute.xlu0 %630
    %632 = vrot.lane.b32.xlu0 %v361, 1
    %v633 = vpop.permute.xlu0 %632
    %vm634 = vcmp.lt.s32.totalorder %v412, 1
    %v635 = vsel %vm634, %v623, %v629
    %v636 = vsel %vm634, %v625, %v631
    %v637 = vsel %vm634, %v627, %v633
    %v638 = vsel %vm634, %v617, %v623
    %v639 = vsel %vm634, %v619, %v625
    %v640 = vsel %vm634, %v621, %v627
    %v641 = vsel %vm634, %v611, %v617
    %v642 = vsel %vm634, %v613, %v619
    %v643 = vsel %vm634, %v615, %v621
    %v644 = vsel %vm634, %v629, %v611
    %v645 = vsel %vm634, %v631, %v613
    %v646 = vsel %vm634, %v633, %v615
    %s647 = scalar_lea.vmem [#allocation3], 288
    %v648 = vld [vmem:[%s647] sm:$0xff]
    %v649 = vld [vmem:[%s647 + $0x8] sm:$0xff]
    %v650 = vld [vmem:[%s647 + $0x10] sm:$0xff]
    %v651 = vld [vmem:[%s647 + $0x18] sm:$0xff]
    %v652 = vld [vmem:[%s647 + $0x20] sm:$0xff]
    %v653 = vld [vmem:[%s647 + $0x28] sm:$0xff]
    %v654 = vld [vmem:[%s647 + $0x30] sm:$0xff]
    %v655 = vld [vmem:[%s647 + $0x38] sm:$0xff]
    %v656 = vld [vmem:[%s647 + $0x40] sm:$0xff]
    %v657 = vld [vmem:[%s647 + $0x48] sm:$0xff]
    %v658 = vld [vmem:[%s647 + $0x50] sm:$0xff]
    %v659 = vld [vmem:[%s647 + $0x58] sm:$0xff]
    %v660 = vmul.f32 %v644, %v648
    %v661 = vmul.f32 %v641, %v649
    %v662 = vmul.f32 %v638, %v650
    %v663 = vmul.f32 %v635, %v651
    %v664 = vmul.f32 %v645, %v652
    %v665 = vmul.f32 %v642, %v653
    %v666 = vmul.f32 %v639, %v654
    %v667 = vmul.f32 %v636, %v655
    %v668 = vmul.f32 %v646, %v656
    %v669 = vmul.f32 %v643, %v657
    %v670 = vmul.f32 %v640, %v658
    %v671 = vmul.f32 %v637, %v659
    %v672 = vadd.f32 %v598, %v660
    %v673 = vadd.f32 %v599, %v661
    %v674 = vadd.f32 %v600, %v662
    %v675 = vadd.f32 %v601, %v663
    %v676 = vadd.f32 %v602, %v664
    %v677 = vadd.f32 %v603, %v665
    %v678 = vadd.f32 %v604, %v666
    %v679 = vadd.f32 %v605, %v667
    %v680 = vadd.f32 %v606, %v668
    %v681 = vadd.f32 %v607, %v669
    %v682 = vadd.f32 %v608, %v670
    %v683 = vadd.f32 %v609, %v671
    %684 = vrot.lane.b32.xlu0 %v350, 127
    %v685 = vpop.permute.xlu0 %684
    %686 = vrot.lane.b32.xlu0 %v354, 127
    %v687 = vpop.permute.xlu0 %686
    %688 = vrot.lane.b32.xlu0 %v358, 127
    %v689 = vpop.permute.xlu0 %688
    %690 = vrot.lane.b32.xlu0 %v351, 127
    %v691 = vpop.permute.xlu0 %690
    %692 = vrot.lane.b32.xlu0 %v355, 127
    %v693 = vpop.permute.xlu0 %692
    %694 = vrot.lane.b32.xlu0 %v359, 127
    %v695 = vpop.permute.xlu0 %694
    %696 = vrot.lane.b32.xlu0 %v352, 127
    %v697 = vpop.permute.xlu0 %696
    %698 = vrot.lane.b32.xlu0 %v356, 127
    %v699 = vpop.permute.xlu0 %698
    %700 = vrot.lane.b32.xlu0 %v360, 127
    %v701 = vpop.permute.xlu0 %700
    %702 = vrot.lane.b32.xlu0 %v353, 127
    %v703 = vpop.permute.xlu0 %702
    %704 = vrot.lane.b32.xlu0 %v357, 127
    %v705 = vpop.permute.xlu0 %704
    %706 = vrot.lane.b32.xlu0 %v361, 127
    %v707 = vpop.permute.xlu0 %706
    %vm708 = vcmp.lt.s32.totalorder %v412, 127
    %v709 = vsel %vm708, %v697, %v703
    %v710 = vsel %vm708, %v699, %v705
    %v711 = vsel %vm708, %v701, %v707
    %v712 = vsel %vm708, %v691, %v697
    %v713 = vsel %vm708, %v693, %v699
    %v714 = vsel %vm708, %v695, %v701
    %v715 = vsel %vm708, %v685, %v691
    %v716 = vsel %vm708, %v687, %v693
    %v717 = vsel %vm708, %v689, %v695
    %v718 = vsel %vm708, %v703, %v685
    %v719 = vsel %vm708, %v705, %v687
    %v720 = vsel %vm708, %v707, %v689
    %s721 = scalar_lea.vmem [#allocation3], 480
    %v722 = vld [vmem:[%s721] sm:$0xff]
    %v723 = vld [vmem:[%s721 + $0x8] sm:$0xff]
    %v724 = vld [vmem:[%s721 + $0x10] sm:$0xff]
    %v725 = vld [vmem:[%s721 + $0x18] sm:$0xff]
    %v726 = vld [vmem:[%s721 + $0x20] sm:$0xff]
    %v727 = vld [vmem:[%s721 + $0x28] sm:$0xff]
    %v728 = vld [vmem:[%s721 + $0x30] sm:$0xff]
    %v729 = vld [vmem:[%s721 + $0x38] sm:$0xff]
    %v730 = vld [vmem:[%s721 + $0x40] sm:$0xff]
    %v731 = vld [vmem:[%s721 + $0x48] sm:$0xff]
    %v732 = vld [vmem:[%s721 + $0x50] sm:$0xff]
    %v733 = vld [vmem:[%s721 + $0x58] sm:$0xff]
    %v734 = vmul.f32 %v715, %v722
    %v735 = vmul.f32 %v712, %v723
    %v736 = vmul.f32 %v709, %v724
    %v737 = vmul.f32 %v718, %v725
    %v738 = vmul.f32 %v716, %v726
    %v739 = vmul.f32 %v713, %v727
    %v740 = vmul.f32 %v710, %v728
    %v741 = vmul.f32 %v719, %v729
    %v742 = vmul.f32 %v717, %v730
    %v743 = vmul.f32 %v714, %v731
    %v744 = vmul.f32 %v711, %v732
    %v745 = vmul.f32 %v720, %v733
    %v746 = vadd.f32 %v672, %v734
    %v747 = vadd.f32 %v673, %v735
    %v748 = vadd.f32 %v674, %v736
    %v749 = vadd.f32 %v675, %v737
    %v750 = vadd.f32 %v676, %v738
    %v751 = vadd.f32 %v677, %v739
    %v752 = vadd.f32 %v678, %v740
    %v753 = vadd.f32 %v679, %v741
    %v754 = vadd.f32 %v680, %v742
    %v755 = vadd.f32 %v681, %v743
    %v756 = vadd.f32 %v682, %v744
    %v757 = vadd.f32 %v683, %v745
    %758 = vrot.lane.b32.xlu0 %v350, 113
    %v759 = vpop.permute.xlu0 %758
    %760 = vrot.lane.b32.xlu0 %v354, 113
    %v761 = vpop.permute.xlu0 %760
    %762 = vrot.lane.b32.xlu0 %v358, 113
    %v763 = vpop.permute.xlu0 %762
    %764 = vrot.lane.b32.xlu0 %v351, 113
    %v765 = vpop.permute.xlu0 %764
    %766 = vrot.lane.b32.xlu0 %v355, 113
    %v767 = vpop.permute.xlu0 %766
    %768 = vrot.lane.b32.xlu0 %v359, 113
    %v769 = vpop.permute.xlu0 %768
    %770 = vrot.lane.b32.xlu0 %v352, 113
    %v771 = vpop.permute.xlu0 %770
    %772 = vrot.lane.b32.xlu0 %v356, 113
    %v773 = vpop.permute.xlu0 %772
    %774 = vrot.lane.b32.xlu0 %v360, 113
    %v775 = vpop.permute.xlu0 %774
    %776 = vrot.lane.b32.xlu0 %v353, 113
    %v777 = vpop.permute.xlu0 %776
    %778 = vrot.lane.b32.xlu0 %v357, 113
    %v779 = vpop.permute.xlu0 %778
    %780 = vrot.lane.b32.xlu0 %v361, 113
    %v781 = vpop.permute.xlu0 %780
    %vm782 = vcmp.lt.s32.totalorder %v412, 113
    %v783 = vsel %vm782, %v771, %v777
    %v784 = vsel %vm782, %v773, %v779
    %v785 = vsel %vm782, %v775, %v781
    %v786 = vsel %vm782, %v765, %v771
    %v787 = vsel %vm782, %v767, %v773
    %v788 = vsel %vm782, %v769, %v775
    %v789 = vsel %vm782, %v759, %v765
    %v790 = vsel %vm782, %v761, %v767
    %v791 = vsel %vm782, %v763, %v769
    %v792 = vsel %vm782, %v777, %v759
    %v793 = vsel %vm782, %v779, %v761
    %v794 = vsel %vm782, %v781, %v763
    %s795 = scalar_lea.vmem [#allocation3], 576
    %v796 = vld [vmem:[%s795] sm:$0xff]
    %v797 = vld [vmem:[%s795 + $0x8] sm:$0xff]
    %v798 = vld [vmem:[%s795 + $0x10] sm:$0xff]
    %v799 = vld [vmem:[%s795 + $0x18] sm:$0xff]
    %v800 = vld [vmem:[%s795 + $0x20] sm:$0xff]
    %v801 = vld [vmem:[%s795 + $0x28] sm:$0xff]
    %v802 = vld [vmem:[%s795 + $0x30] sm:$0xff]
    %v803 = vld [vmem:[%s795 + $0x38] sm:$0xff]
    %v804 = vld [vmem:[%s795 + $0x40] sm:$0xff]
    %v805 = vld [vmem:[%s795 + $0x48] sm:$0xff]
    %v806 = vld [vmem:[%s795 + $0x50] sm:$0xff]
    %v807 = vld [vmem:[%s795 + $0x58] sm:$0xff]
    %v808 = vmul.f32 %v789, %v796
    %v809 = vmul.f32 %v786, %v797
    %v810 = vmul.f32 %v783, %v798
    %v811 = vmul.f32 %v792, %v799
    %v812 = vmul.f32 %v790, %v800
    %v813 = vmul.f32 %v787, %v801
    %v814 = vmul.f32 %v784, %v802
    %v815 = vmul.f32 %v793, %v803
    %v816 = vmul.f32 %v791, %v804
    %v817 = vmul.f32 %v788, %v805
    %v818 = vmul.f32 %v785, %v806
    %v819 = vmul.f32 %v794, %v807
    %v820 = vadd.f32 %v746, %v808
    %v821 = vadd.f32 %v747, %v809
    %v822 = vadd.f32 %v748, %v810
    %v823 = vadd.f32 %v749, %v811
    %v824 = vadd.f32 %v750, %v812
    %v825 = vadd.f32 %v751, %v813
    %v826 = vadd.f32 %v752, %v814
    %v827 = vadd.f32 %v753, %v815
    %v828 = vadd.f32 %v754, %v816
    %v829 = vadd.f32 %v755, %v817
    %v830 = vadd.f32 %v756, %v818
    %v831 = vadd.f32 %v757, %v819
    %832 = vrot.lane.b32.xlu0 %v350, 112
    %v833 = vpop.permute.xlu0 %832
    %834 = vrot.lane.b32.xlu0 %v354, 112
    %v835 = vpop.permute.xlu0 %834
    %836 = vrot.lane.b32.xlu0 %v358, 112
    %v837 = vpop.permute.xlu0 %836
    %838 = vrot.lane.b32.xlu0 %v351, 112
    %v839 = vpop.permute.xlu0 %838
    %840 = vrot.lane.b32.xlu0 %v355, 112
    %v841 = vpop.permute.xlu0 %840
    %842 = vrot.lane.b32.xlu0 %v359, 112
    %v843 = vpop.permute.xlu0 %842
    %844 = vrot.lane.b32.xlu0 %v352, 112
    %v845 = vpop.permute.xlu0 %844
    %846 = vrot.lane.b32.xlu0 %v356, 112
    %v847 = vpop.permute.xlu0 %846
    %848 = vrot.lane.b32.xlu0 %v360, 112
    %v849 = vpop.permute.xlu0 %848
    %850 = vrot.lane.b32.xlu0 %v353, 112
    %v851 = vpop.permute.xlu0 %850
    %852 = vrot.lane.b32.xlu0 %v357, 112
    %v853 = vpop.permute.xlu0 %852
    %854 = vrot.lane.b32.xlu0 %v361, 112
    %v855 = vpop.permute.xlu0 %854
    %vm856 = vcmp.lt.s32.totalorder %v412, 112
    %v857 = vsel %vm856, %v845, %v851
    %v858 = vsel %vm856, %v847, %v853
    %v859 = vsel %vm856, %v849, %v855
    %v860 = vsel %vm856, %v839, %v845
    %v861 = vsel %vm856, %v841, %v847
    %v862 = vsel %vm856, %v843, %v849
    %v863 = vsel %vm856, %v833, %v839
    %v864 = vsel %vm856, %v835, %v841
    %v865 = vsel %vm856, %v837, %v843
    %v866 = vsel %vm856, %v851, %v833
    %v867 = vsel %vm856, %v853, %v835
    %v868 = vsel %vm856, %v855, %v837
    %s869 = scalar_lea.vmem [#allocation3], 672
    %v870 = vld [vmem:[%s869] sm:$0xff]
    %v871 = vld [vmem:[%s869 + $0x8] sm:$0xff]
    %v872 = vld [vmem:[%s869 + $0x10] sm:$0xff]
    %v873 = vld [vmem:[%s869 + $0x18] sm:$0xff]
    %v874 = vld [vmem:[%s869 + $0x20] sm:$0xff]
    %v875 = vld [vmem:[%s869 + $0x28] sm:$0xff]
    %v876 = vld [vmem:[%s869 + $0x30] sm:$0xff]
    %v877 = vld [vmem:[%s869 + $0x38] sm:$0xff]
    %v878 = vld [vmem:[%s869 + $0x40] sm:$0xff]
    %v879 = vld [vmem:[%s869 + $0x48] sm:$0xff]
    %v880 = vld [vmem:[%s869 + $0x50] sm:$0xff]
    %v881 = vld [vmem:[%s869 + $0x58] sm:$0xff]
    %v882 = vmul.f32 %v863, %v870
    %v883 = vmul.f32 %v860, %v871
    %v884 = vmul.f32 %v857, %v872
    %v885 = vmul.f32 %v866, %v873
    %v886 = vmul.f32 %v864, %v874
    %v887 = vmul.f32 %v861, %v875
    %v888 = vmul.f32 %v858, %v876
    %v889 = vmul.f32 %v867, %v877
    %v890 = vmul.f32 %v865, %v878
    %v891 = vmul.f32 %v862, %v879
    %v892 = vmul.f32 %v859, %v880
    %v893 = vmul.f32 %v868, %v881
    %v894 = vadd.f32 %v820, %v882
    %v895 = vadd.f32 %v821, %v883
    %v896 = vadd.f32 %v822, %v884
    %v897 = vadd.f32 %v823, %v885
    %v898 = vadd.f32 %v824, %v886
    %v899 = vadd.f32 %v825, %v887
    %v900 = vadd.f32 %v826, %v888
    %v901 = vadd.f32 %v827, %v889
    %v902 = vadd.f32 %v828, %v890
    %v903 = vadd.f32 %v829, %v891
    %v904 = vadd.f32 %v830, %v892
    %v905 = vadd.f32 %v831, %v893
    %906 = vrot.lane.b32.xlu0 %v350, 111
    %v907 = vpop.permute.xlu0 %906
    %908 = vrot.lane.b32.xlu0 %v354, 111
    %v909 = vpop.permute.xlu0 %908
    %910 = vrot.lane.b32.xlu0 %v358, 111
    %v911 = vpop.permute.xlu0 %910
    %912 = vrot.lane.b32.xlu0 %v351, 111
    %v913 = vpop.permute.xlu0 %912
    %914 = vrot.lane.b32.xlu0 %v355, 111
    %v915 = vpop.permute.xlu0 %914
    %916 = vrot.lane.b32.xlu0 %v359, 111
    %v917 = vpop.permute.xlu0 %916
    %918 = vrot.lane.b32.xlu0 %v352, 111
    %v919 = vpop.permute.xlu0 %918
    %920 = vrot.lane.b32.xlu0 %v356, 111
    %v921 = vpop.permute.xlu0 %920
    %922 = vrot.lane.b32.xlu0 %v360, 111
    %v923 = vpop.permute.xlu0 %922
    %924 = vrot.lane.b32.xlu0 %v353, 111
    %v925 = vpop.permute.xlu0 %924
    %926 = vrot.lane.b32.xlu0 %v357, 111
    %v927 = vpop.permute.xlu0 %926
    %928 = vrot.lane.b32.xlu0 %v361, 111
    %v929 = vpop.permute.xlu0 %928
    %vm930 = vcmp.lt.s32.totalorder %v412, 111
    %v931 = vsel %vm930, %v919, %v925
    %v932 = vsel %vm930, %v921, %v927
    %v933 = vsel %vm930, %v923, %v929
    %v934 = vsel %vm930, %v913, %v919
    %v935 = vsel %vm930, %v915, %v921
    %v936 = vsel %vm930, %v917, %v923
    %v937 = vsel %vm930, %v907, %v913
    %v938 = vsel %vm930, %v909, %v915
    %v939 = vsel %vm930, %v911, %v917
    %v940 = vsel %vm930, %v925, %v907
    %v941 = vsel %vm930, %v927, %v909
    %v942 = vsel %vm930, %v929, %v911
    %s943 = scalar_lea.vmem [#allocation3], 768
    %v944 = vld [vmem:[%s943] sm:$0xff]
    %v945 = vld [vmem:[%s943 + $0x8] sm:$0xff]
    %v946 = vld [vmem:[%s943 + $0x10] sm:$0xff]
    %v947 = vld [vmem:[%s943 + $0x18] sm:$0xff]
    %v948 = vld [vmem:[%s943 + $0x20] sm:$0xff]
    %v949 = vld [vmem:[%s943 + $0x28] sm:$0xff]
    %v950 = vld [vmem:[%s943 + $0x30] sm:$0xff]
    %v951 = vld [vmem:[%s943 + $0x38] sm:$0xff]
    %v952 = vld [vmem:[%s943 + $0x40] sm:$0xff]
    %v953 = vld [vmem:[%s943 + $0x48] sm:$0xff]
    %v954 = vld [vmem:[%s943 + $0x50] sm:$0xff]
    %v955 = vld [vmem:[%s943 + $0x58] sm:$0xff]
    %v956 = vmul.f32 %v937, %v944
    %v957 = vmul.f32 %v934, %v945
    %v958 = vmul.f32 %v931, %v946
    %v959 = vmul.f32 %v940, %v947
    %v960 = vmul.f32 %v938, %v948
    %v961 = vmul.f32 %v935, %v949
    %v962 = vmul.f32 %v932, %v950
    %v963 = vmul.f32 %v941, %v951
    %v964 = vmul.f32 %v939, %v952
    %v965 = vmul.f32 %v936, %v953
    %v966 = vmul.f32 %v933, %v954
    %v967 = vmul.f32 %v942, %v955
    %v968 = vadd.f32 %v894, %v956
    %v969 = vadd.f32 %v895, %v957
    %v970 = vadd.f32 %v896, %v958
    %v971 = vadd.f32 %v897, %v959
    %v972 = vadd.f32 %v898, %v960
    %v973 = vadd.f32 %v899, %v961
    %v974 = vadd.f32 %v900, %v962
    %v975 = vadd.f32 %v901, %v963
    %v976 = vadd.f32 %v902, %v964
    %v977 = vadd.f32 %v903, %v965
    %v978 = vadd.f32 %v904, %v966
    %v979 = vadd.f32 %v905, %v967
    %v980 = vadd.f32 %v968, %v969
    %v981 = vadd.f32 %v980, %v970
    %v982 = vadd.f32 %v981, %v971
    %983 = vadd.xlane.f32.xlu0 %v982
    %v984 = vpop.xlane.xlu0 %983
    %v985 = vadd.f32 %v972, %v973
    %v986 = vadd.f32 %v985, %v974
    %v987 = vadd.f32 %v986, %v975
    %988 = vadd.xlane.f32.xlu0 %v987
    %v989 = vpop.xlane.xlu0 %988
    %v990 = vadd.f32 %v976, %v977
    %v991 = vadd.f32 %v990, %v978
    %v992 = vadd.f32 %v991, %v979
    %993 = vadd.xlane.f32.xlu0 %v992
    %v994 = vpop.xlane.xlu0 %993
    %v995 = vmul.f32 %v968, %v968
    %v996 = vmul.f32 %v969, %v969
    %v997 = vmul.f32 %v970, %v970
    %v998 = vmul.f32 %v971, %v971
    %v999 = vmul.f32 %v972, %v972
    %v1000 = vmul.f32 %v973, %v973
    %v1001 = vmul.f32 %v974, %v974
    %v1002 = vmul.f32 %v975, %v975
    %v1003 = vmul.f32 %v976, %v976
    %v1004 = vmul.f32 %v977, %v977
    %v1005 = vmul.f32 %v978, %v978
    %v1006 = vmul.f32 %v979, %v979
    %v1007 = vadd.f32 %v995, %v996
    %v1008 = vadd.f32 %v1007, %v997
    %v1009 = vadd.f32 %v1008, %v998
    %1010 = vadd.xlane.f32.xlu0 %v1009
    %v1011 = vpop.xlane.xlu0 %1010
    %v1012 = vadd.f32 %v999, %v1000
    %v1013 = vadd.f32 %v1012, %v1001
    %v1014 = vadd.f32 %v1013, %v1002
    %1015 = vadd.xlane.f32.xlu0 %v1014
    %v1016 = vpop.xlane.xlu0 %1015
    %v1017 = vadd.f32 %v1003, %v1004
    %v1018 = vadd.f32 %v1017, %v1005
    %v1019 = vadd.f32 %v1018, %v1006
    %1020 = vadd.xlane.f32.xlu0 %v1019
    %v1021 = vpop.xlane.xlu0 %1020
    %v1022 = vmul.f32 %v984, 0.001953125
    %v1023 = vmul.f32 %v989, 0.001953125
    %v1024 = vmul.f32 %v994, 0.001953125
    %v1025 = vmul.f32 %v1011, 0.001953125
    %v1026 = vmul.f32 %v1016, 0.001953125
    %v1027 = vmul.f32 %v1021, 0.001953125
    %v1028 = vmul.f32 %v1022, %v1022
    %v1029 = vmul.f32 %v1023, %v1023
    %v1030 = vmul.f32 %v1024, %v1024
    %v1031 = vsub.f32 %v1025, %v1028
    %v1032 = vsub.f32 %v1026, %v1029
    %v1033 = vsub.f32 %v1027, %v1030
    %v1034 = vadd.f32 %v1031, 1e-05
    %v1035 = vadd.f32 %v1032, 1e-05
    %v1036 = vadd.f32 %v1033, 1e-05
    %v1037 = vrsqrt.pop %v1034
    %v1038 = vmul.f32 %v1037, %v1034
    %v1039 = vmul.f32 %v1038, %v1037
    %v1040 = vmul.f32 0.5, %v1039
    %v1041 = vsub.f32 1.5, %v1040
    %v1042 = vmul.f32 %v1037, %v1041
    %vm1043 = vweird.f32 %v1034
    %vm1044 = vweird.f32 %v1037
    %vm1045 = vmor %vm1043, %vm1044
    %v1046 = vsel %vm1045, %v1037, %v1042
    %v1047 = vrsqrt.pop %v1035
    %v1048 = vmul.f32 %v1047, %v1035
    %v1049 = vmul.f32 %v1048, %v1047
    %v1050 = vmul.f32 0.5, %v1049
    %v1051 = vsub.f32 1.5, %v1050
    %v1052 = vmul.f32 %v1047, %v1051
    %vm1053 = vweird.f32 %v1035
    %vm1054 = vweird.f32 %v1047
    %vm1055 = vmor %vm1053, %vm1054
    %v1056 = vsel %vm1055, %v1047, %v1052
    %v1057 = vrsqrt.pop %v1036
    %v1058 = vmul.f32 %v1057, %v1036
    %v1059 = vmul.f32 %v1058, %v1057
    %v1060 = vmul.f32 0.5, %v1059
    %v1061 = vsub.f32 1.5, %v1060
    %v1062 = vmul.f32 %v1057, %v1061
    %vm1063 = vweird.f32 %v1036
    %vm1064 = vweird.f32 %v1057
    %vm1065 = vmor %vm1063, %vm1064
    %v1066 = vsel %vm1065, %v1057, %v1062
    %v1067 = vmul.f32 %v1046, %v40
    %v1068 = vmul.f32 %v1056, %v41
    %v1069 = vmul.f32 %v1066, %v42
    %v1070 = vmul.f32 %v1022, %v1067
    %v1071 = vmul.f32 %v1023, %v1068
    %v1072 = vmul.f32 %v1024, %v1069
    %1076 = vrot.lane.b32.xlu0 %v1070, 1
    %v1077 = vpop.permute.xlu0 %1076
    %1078 = vrot.lane.b32.xlu0 %v1071, 1
    %v1079 = vpop.permute.xlu0 %1078
    %1080 = vrot.lane.b32.xlu0 %v1072, 1
    %v1081 = vpop.permute.xlu0 %1080
    %v1085 = vsub.f32 %v40, %v1077
    %v1086 = vsub.f32 %v41, %v1079
    %v1087 = vsub.f32 %v42, %v1081
    %1089 = vset.pattern.permute.xlu0 6
    %1090 = vperm.xlu0 %1089, %v1067
    %v1091 = vpop.permute.xlu0 %1090
    %1094 = vset.pattern.permute.xlu0 6
    %1095 = vperm.xlu0 %1094, %v1068
    %v1096 = vpop.permute.xlu0 %1095
    %1099 = vset.pattern.permute.xlu0 6
    %1100 = vperm.xlu0 %1099, %v1069
    %v1101 = vpop.permute.xlu0 %1100
    %v1103 = vmul.f32 %v968, %v1091
    %v1104 = vmul.f32 %v969, %v1091
    %v1105 = vmul.f32 %v970, %v1091
    %v1106 = vmul.f32 %v971, %v1091
    %v1107 = vmul.f32 %v972, %v1096
    %v1108 = vmul.f32 %v973, %v1096
    %v1109 = vmul.f32 %v974, %v1096
    %v1110 = vmul.f32 %v975, %v1096
    %v1111 = vmul.f32 %v976, %v1101
    %v1112 = vmul.f32 %v977, %v1101
    %v1113 = vmul.f32 %v978, %v1101
    %v1114 = vmul.f32 %v979, %v1101
    %1116 = vset.pattern.permute.xlu0 7
    %1117 = vperm.xlu0 %1116, %v1085
    %v1118 = vpop.permute.xlu0 %1117
    %1121 = vset.pattern.permute.xlu0 7
    %1122 = vperm.xlu0 %1121, %v1086
    %v1123 = vpop.permute.xlu0 %1122
    %1126 = vset.pattern.permute.xlu0 7
    %1127 = vperm.xlu0 %1126, %v1087
    %v1128 = vpop.permute.xlu0 %1127
    %v1130 = vadd.f32 %v1103, %v1118
    %v1131 = vadd.f32 %v1104, %v1118
    %v1132 = vadd.f32 %v1105, %v1118
    %v1133 = vadd.f32 %v1106, %v1118
    %v1134 = vadd.f32 %v1107, %v1123
    %v1135 = vadd.f32 %v1108, %v1123
    %v1136 = vadd.f32 %v1109, %v1123
    %v1137 = vadd.f32 %v1110, %v1123
    %v1138 = vadd.f32 %v1111, %v1128
    %v1139 = vadd.f32 %v1112, %v1128
    %v1140 = vadd.f32 %v1113, %v1128
    %v1141 = vadd.f32 %v1114, %v1128
    %v1142 = vmax.f32 %v1130, 0.0
    %v1143 = vmax.f32 %v1131, 0.0
    %v1144 = vmax.f32 %v1132, 0.0
    %v1145 = vmax.f32 %v1133, 0.0
    %v1146 = vmax.f32 %v1134, 0.0
    %v1147 = vmax.f32 %v1135, 0.0
    %v1148 = vmax.f32 %v1136, 0.0
    %v1149 = vmax.f32 %v1137, 0.0
    %v1150 = vmax.f32 %v1138, 0.0
    %v1151 = vmax.f32 %v1139, 0.0
    %v1152 = vmax.f32 %v1140, 0.0
    %v1153 = vmax.f32 %v1141, 0.0
    %v1154 = vmin.f32 %v1142, 6.0
    %v1155 = vmin.f32 %v1143, 6.0
    %v1156 = vmin.f32 %v1144, 6.0
    %v1157 = vmin.f32 %v1145, 6.0
    %v1158 = vmin.f32 %v1146, 6.0
    %v1159 = vmin.f32 %v1147, 6.0
    %v1160 = vmin.f32 %v1148, 6.0
    %v1161 = vmin.f32 %v1149, 6.0
    %v1162 = vmin.f32 %v1150, 6.0
    %v1163 = vmin.f32 %v1151, 6.0
    %v1164 = vmin.f32 %v1152, 6.0
    %v1165 = vmin.f32 %v1153, 6.0
    %vm1166 = vcmask 195584
    %v1168 = vsel %vm1166, %v43, 0
    %1170 = vmatpush.msra.mxu0 0.0
    %1171 = vmatpush.msra.mxu0 0.0
    %1172 = vmatpush.msra.mxu0 0.0
    %1173 = vmatpush.msra.mxu0 0.0
    %1174 = vmatpush.msra.mxu0 0.0
    %1175 = vmatpush.msra.mxu0 0.0
    %1176 = vmatpush.msra.mxu0 0.0
    %1177 = vmatpush.msra.mxu0 0.0
    %1178 = vmatpush.msra.mxu0 0.0
    %1179 = vmatpush.msra.mxu0 0.0
    %1180 = vmatpush.msra.mxu0 0.0
    %1181 = vmatpush.msra.mxu0 0.0
    %1182 = vmatpush.msra.mxu0 0.0
    %1183 = vmatpush.msra.mxu0 %v1162
    %1184 = vmatpush.msra.mxu0 %v1158
    %1185 = vmatpush.msra.mxu0 %v1154
    %1186 = vmatmul.f32.gmra.mxu0 %v1168
    %v1187 = vpop.f32.mrf.mxu0
    %v1188 = vadd.f32 0.0, %v1187
    %1189 = vdwg.mxu0
    %1190 = vmatpush.msra.mxu0 0.0
    %1191 = vmatpush.msra.mxu0 0.0
    %1192 = vmatpush.msra.mxu0 0.0
    %1193 = vmatpush.msra.mxu0 0.0
    %1194 = vmatpush.msra.mxu0 0.0
    %1195 = vmatpush.msra.mxu0 0.0
    %1196 = vmatpush.msra.mxu0 0.0
    %1197 = vmatpush.msra.mxu0 0.0
    %1198 = vmatpush.msra.mxu0 0.0
    %1199 = vmatpush.msra.mxu0 0.0
    %1200 = vmatpush.msra.mxu0 0.0
    %1201 = vmatpush.msra.mxu0 0.0
    %1202 = vmatpush.msra.mxu0 0.0
    %1203 = vmatpush.msra.mxu0 %v1163
    %1204 = vmatpush.msra.mxu0 %v1159
    %1205 = vmatpush.msra.mxu0 %v1155
    %1206 = vmatmul.f32.gmra.mxu0 %v1168
    %v1207 = vpop.f32.mrf.mxu0
    %v1208 = vadd.f32 0.0, %v1207
    %1209 = vdwg.mxu0
    %1210 = vmatpush.msra.mxu0 0.0
    %1211 = vmatpush.msra.mxu0 0.0
    %1212 = vmatpush.msra.mxu0 0.0
    %1213 = vmatpush.msra.mxu0 0.0
    %1214 = vmatpush.msra.mxu0 0.0
    %1215 = vmatpush.msra.mxu0 0.0
    %1216 = vmatpush.msra.mxu0 0.0
    %1217 = vmatpush.msra.mxu0 0.0
    %1218 = vmatpush.msra.mxu0 0.0
    %1219 = vmatpush.msra.mxu0 0.0
    %1220 = vmatpush.msra.mxu0 0.0
    %1221 = vmatpush.msra.mxu0 0.0
    %1222 = vmatpush.msra.mxu0 0.0
    %1223 = vmatpush.msra.mxu0 %v1164
    %1224 = vmatpush.msra.mxu0 %v1160
    %1225 = vmatpush.msra.mxu0 %v1156
    %1226 = vmatmul.f32.gmra.mxu0 %v1168
    %v1227 = vpop.f32.mrf.mxu0
    %v1228 = vadd.f32 0.0, %v1227
    %1229 = vdwg.mxu0
    %1230 = vmatpush.msra.mxu0 0.0
    %1231 = vmatpush.msra.mxu0 0.0
    %1232 = vmatpush.msra.mxu0 0.0
    %1233 = vmatpush.msra.mxu0 0.0
    %1234 = vmatpush.msra.mxu0 0.0
    %1235 = vmatpush.msra.mxu0 0.0
    %1236 = vmatpush.msra.mxu0 0.0
    %1237 = vmatpush.msra.mxu0 0.0
    %1238 = vmatpush.msra.mxu0 0.0
    %1239 = vmatpush.msra.mxu0 0.0
    %1240 = vmatpush.msra.mxu0 0.0
    %1241 = vmatpush.msra.mxu0 0.0
    %1242 = vmatpush.msra.mxu0 0.0
    %1243 = vmatpush.msra.mxu0 %v1165
    %1244 = vmatpush.msra.mxu0 %v1161
    %1245 = vmatpush.msra.mxu0 %v1157
    %1246 = vmatmul.f32.gmra.mxu0 %v1168
    %v1247 = vpop.f32.mrf.mxu0
    %v1248 = vadd.f32 0.0, %v1247
    %1249 = vdwg.mxu0
    %v1250 = vsel %vm63, %v1188, 0.0
    %v1251 = vsel %vm63, %v1208, 0.0
    %v1252 = vadd.f32 %v1250, %v1251
    %v1253 = vsel %vm63, %v1228, 0.0
    %v1254 = vadd.f32 %v1252, %v1253
    %v1255 = vsel %vm63, %v1248, 0.0
    %v1256 = vadd.f32 %v1254, %v1255
    %1257 = vadd.xlane.f32.xlu0 %v1256
    %v1258 = vpop.xlane.xlu0 %1257
    %v1259 = vmul.f32 %v1188, %v1188
    %v1260 = vmul.f32 %v1208, %v1208
    %v1261 = vmul.f32 %v1228, %v1228
    %v1262 = vmul.f32 %v1248, %v1248
    %v1263 = vsel %vm63, %v1259, 0.0
    %v1264 = vsel %vm63, %v1260, 0.0
    %v1265 = vadd.f32 %v1263, %v1264
    %v1266 = vsel %vm63, %v1261, 0.0
    %v1267 = vadd.f32 %v1265, %v1266
    %v1268 = vsel %vm63, %v1262, 0.0
    %v1269 = vadd.f32 %v1267, %v1268
    %1270 = vadd.xlane.f32.xlu0 %v1269
    %v1271 = vpop.xlane.xlu0 %1270
    %v1272 = vmul.f32 %v1258, 0.001953125
    %v1273 = vmul.f32 %v1271, 0.001953125
    %v1274 = vmul.f32 %v1272, %v1272
    %v1275 = vsub.f32 %v1273, %v1274
    %v1276 = vadd.f32 %v1275, 1e-05
    %v1277 = vrsqrt.pop %v1276
    %v1278 = vmul.f32 %v1277, %v1276
    %v1279 = vmul.f32 %v1278, %v1277
    %v1280 = vmul.f32 0.5, %v1279
    %v1281 = vsub.f32 1.5, %v1280
    %v1282 = vmul.f32 %v1277, %v1281
    %vm1283 = vweird.f32 %v1276
    %vm1284 = vweird.f32 %v1277
    %vm1285 = vmor %vm1283, %vm1284
    %v1286 = vsel %vm1285, %v1277, %v1282
    %v1287 = vmul.f32 %v1286, %v43
    %v1288 = vmul.f32 %v1272, %v1287
    %1290 = vrot.lane.b32.xlu0 %v1288, 1
    %v1291 = vpop.permute.xlu0 %1290
    %v1293 = vsub.f32 %v43, %v1291
    %1295 = vset.pattern.permute.xlu0 24
    %1296 = vperm.xlu0 %1295, %v1287
    %v1297 = vpop.permute.xlu0 %1296
    %v1299 = vmul.f32 %v1188, %v1297
    %v1300 = vmul.f32 %v1208, %v1297
    %v1301 = vmul.f32 %v1228, %v1297
    %v1302 = vmul.f32 %v1248, %v1297
    %1304 = vset.pattern.permute.xlu0 25
    %1305 = vperm.xlu0 %1304, %v1293
    %v1306 = vpop.permute.xlu0 %1305
    %v1308 = vadd.f32 %v1299, %v1306
    %v1309 = vadd.f32 %v1300, %v1306
    %v1310 = vadd.f32 %v1301, %v1306
    %v1311 = vadd.f32 %v1302, %v1306
    %1312 = vst [vmem:[#allocation1] ss:$2 sm:$0xff] %v38
    %s1313 = scalar_lea.vmem [#allocation1], 16
    %1314 = vst [vmem:[%s1313] ss:$2 sm:$0xff] %v39
    %v1315 = vld.sshfl [vmem:[#allocation1] sm:$0xff pattern:$0x75316420]
    %v1316 = vld.sshfl [vmem:[#allocation1 + $0x8] sm:$0xff pattern:$0x75316420]
    %v1317 = vld.sshfl [vmem:[#allocation1 + $0x10] sm:$0xff pattern:$0x75316420]
    %v1318 = vld.sshfl [vmem:[#allocation1 + $0x18] sm:$0xff pattern:$0x75316420]
    %v1323 = vadd.f32 %v1308, %v1315
    %v1324 = vadd.f32 %v1309, %v1316
    %v1325 = vadd.f32 %v1310, %v1317
    %v1326 = vadd.f32 %v1311, %v1318
    %v1329 = vrot.slane %v1324, 4
    %v1330 = vsel %vm63, %v1323, %v1329
    %1332 = vst [vmem:[%s4] sm:$0xff] %v1330
    %v1335 = vrot.slane %v1326, 4
    %v1336 = vsel %vm63, %v1325, %v1335
    %s1338 = scalar_lea.vmem %s4, 8
    %1339 = vst [vmem:[%s1338] sm:$0xff] %v1336
    // Predicated region
    $region22: #{inverted_residual.1} parent=1 // pred_check
      _
    $region23: #{inverted_residual.1} parent=1 // pred_check_branch
      %1341 = sbr.rel (0) target = $region25
    $region24: #{inverted_residual.1} parent=1 // pred_region
      _
    $region25: #{inverted_residual.1} parent=1 // pred_fallthru
      _
    // Predicated region
    $region26: #{inverted_residual.1} parent=1 // pred_check
      _
    $region27: #{inverted_residual.1} parent=1 // pred_check_branch
      %1343 = sbr.rel (0) target = $region29
    $region28: #{inverted_residual.1} parent=1 // pred_region
      _
    $region29: #{inverted_residual.1} parent=1 // pred_fallthru
      _
    %1344 = vsyncpa [#allocation4], 1

</llo_original>
